<compile_context>
chip_gen: v7x
topology: tpu7x:2x2x1
jax: 0.10.0
libtpu: 0.0.40
codegen_flags: <defaults>
</compile_context>

<pallas_src>
import functools
import math

import jax
import jax.numpy as jnp
import numpy as np
from jax.experimental import pallas as pl
from jax.experimental.pallas import tpu as pltpu


def _encoder_kernel(x_ref, w_ref, vec_ref, o_ref, attn_ref, *,
                    tb, S, head_num, eps):
    layer = pl.program_id(1)

    # Layer 0: seed the resident output block with the HBM input once.
    # (out_specs block index is constant across the layer axis, so o_ref is the
    #  persistent VMEM activation for the whole layer sweep of this batch tile.)
    @pl.when(layer == 0)
    def _():
        o_ref[...] = x_ref[...]

    x = o_ref[...].astype(jnp.float32)            # (M, E) previous activation
    M, E = x.shape
    D = E // head_num
    inv_scale = 1.0 / math.sqrt(D)

    w = w_ref[0]                                  # (5E, E) bf16 weight slab
    vecs = vec_ref[0]                             # (16, E) f32 vector slab
    bq, bk, bv = vecs[0:1], vecs[1:2], vecs[2:3]
    g1, be1 = vecs[3:4], vecs[4:5]
    b1, b2 = vecs[5:6], vecs[6:7]
    g2, be2 = vecs[7:8], vecs[8:9]

    xb = x.astype(jnp.bfloat16)

    # --- SelfAttention: QKV projection as 3 separate MXU matmuls (bf16 in,
    #     f32 accumulate); avoids slicing a lane-sparse (M, 3E) result. -------
    q = jnp.dot(xb, w[0:E], preferred_element_type=jnp.float32) + bq
    k = jnp.dot(xb, w[E:2 * E], preferred_element_type=jnp.float32) + bk
    v = jnp.dot(xb, w[2 * E:3 * E], preferred_element_type=jnp.float32) + bv

    q3 = q.reshape(tb, S, E)
    k3 = k.reshape(tb, S, E)
    v3 = v.reshape(tb, S, E).astype(jnp.bfloat16)

    # --- multi-head attention (weights pre-permuted -> contiguous heads). ----
    # TODO(synk): for long sequences, tile the key axis (flash-style online
    # softmax) instead of materializing (tb, S, S) scores per head.
    for h in range(head_num):                     # small head count: unrolled
        lo = h * D
        qh = q3[:, :, lo:lo + D].astype(jnp.bfloat16)
        kh = k3[:, :, lo:lo + D].astype(jnp.bfloat16)
        vh = v3[:, :, lo:lo + D]
        s = jnp.einsum('bqd,bkd->bqk', qh, kh,
                       preferred_element_type=jnp.float32) * inv_scale
        m = jnp.max(s, axis=-1, keepdims=True)
        e = jnp.exp(s - m)
        p = e * pl.reciprocal(jnp.sum(e, axis=-1, keepdims=True), approx=True)
        oh = jnp.einsum('bqk,bkd->bqd', p.astype(jnp.bfloat16), vh,
                        preferred_element_type=jnp.float32)   # (tb, S, D)
        # blocked head merge; residual add fused into the store (saves one
        # full-width read-modify pass, helps v5e's single vst slot)
        attn_ref[:, lo:lo + D] = oh.reshape(M, D) + x[:, lo:lo + D]

    h1 = attn_ref[...]                            # x + attention(x)

    # --- LayerNorm 1 (single-pass statistics, f32) ---------------------------
    mu1 = jnp.mean(h1, axis=-1, keepdims=True)
    var1 = jnp.maximum(jnp.mean(h1 * h1, axis=-1, keepdims=True) - mu1 * mu1, 0.0)
    y1 = (h1 - mu1) * jax.lax.rsqrt(var1 + eps) * g1 + be1

    # --- FFN: Linear -> ReLU -> Linear (bf16 MXU, f32 accumulate) ------------
    f = jnp.dot(y1.astype(jnp.bfloat16), w[3 * E:4 * E],
                preferred_element_type=jnp.float32) + b1
    f = jnp.maximum(f, 0.0)
    f = jnp.dot(f.astype(jnp.bfloat16), w[4 * E:5 * E],
                preferred_element_type=jnp.float32) + b2

    # --- residual + LayerNorm 2 ----------------------------------------------
    h2 = y1 + f
    mu2 = jnp.mean(h2, axis=-1, keepdims=True)
    var2 = jnp.maximum(jnp.mean(h2 * h2, axis=-1, keepdims=True) - mu2 * mu2, 0.0)
    y2 = (h2 - mu2) * jax.lax.rsqrt(var2 + eps) * g2 + be2

    # Activation stays resident in o_ref for the next layer; HBM writeback
    # happens when the batch-tile block index changes / the grid ends.
    o_ref[...] = y2.astype(o_ref.dtype)


def _vmem_budget_bytes(tb, S, E):
    m = tb * S
    weights = 2 * 5 * E * E * 2          # double-buffered bf16 weight slab
    vectors = 2 * 16 * E * 4             # double-buffered f32 vector slab
    acts = 4 * m * E * 4                 # x block, resident out block, attn slab
    softmax = 4 * m * S * 4              # per-head score/softmax temporaries
    est = weights + vectors + acts + softmax + (8 << 20)   # + compiler scratch
    return int(min(64 << 20, max(32 << 20, est)))          # fits v7x's 64 MiB


def encoder_forward(x, params, head_num, eps=1e-5, batch_tile=1):
    """x: (B, S, E); params from init_params (layer-stacked slabs)."""
    B, S, E = x.shape
    L = params["w_slab"].shape[0]
    assert E % head_num == 0 and B % batch_tile == 0
    tb = batch_tile
    M = tb * S
    x2 = x.reshape(B * S, E)                      # fold batch into the matmul M dim

    kern = functools.partial(_encoder_kernel, tb=tb, S=S,
                             head_num=head_num, eps=eps)
    out = pl.pallas_call(
        kern,
        out_shape=jax.ShapeDtypeStruct((B * S, E), x.dtype),
        grid=(B // tb, L),
        in_specs=[
            pl.BlockSpec((M, E), lambda b, l: (b, 0)),            # activations
            pl.BlockSpec((1, 5 * E, E), lambda b, l: (l, 0, 0)),  # weight slab
            pl.BlockSpec((1, 16, E), lambda b, l: (l, 0, 0)),     # vector slab
        ],
        out_specs=pl.BlockSpec((M, E), lambda b, l: (b, 0)),
        scratch_shapes=[pltpu.VMEM((M, E), jnp.float32)],         # attn slab
        compiler_params=pltpu.CompilerParams(
            dimension_semantics=("parallel", "arbitrary"),        # batch || layers seq
            vmem_limit_bytes=_vmem_budget_bytes(tb, S, E)),
    )(x2, params["w_slab"], params["vec_slab"])
    return out.reshape(B, S, E)


# ---------------- deterministic parameter init (shapes per __init__) --------

def _init_layer_params(key, E, head_num):
    D = E // head_num
    ks = jax.random.split(key, 10)
    w_qkv = jax.random.normal(ks[0], (E, 3 * E), jnp.float32) / np.sqrt(E)
    b_qkv = 0.02 * jax.random.normal(ks[1], (3 * E,), jnp.float32)
    w1 = jax.random.normal(ks[2], (E, E), jnp.float32) / np.sqrt(E)
    b1 = 0.02 * jax.random.normal(ks[3], (E,), jnp.float32)
    w2 = jax.random.normal(ks[4], (E, E), jnp.float32) / np.sqrt(E)
    b2 = 0.02 * jax.random.normal(ks[5], (E,), jnp.float32)
    g1 = 1.0 + 0.1 * jax.random.normal(ks[6], (E,), jnp.float32)
    beta1 = 0.1 * jax.random.normal(ks[7], (E,), jnp.float32)
    g2 = 1.0 + 0.1 * jax.random.normal(ks[8], (E,), jnp.float32)
    beta2 = 0.1 * jax.random.normal(ks[9], (E,), jnp.float32)

    # Column permutation turning the reference's interleaved head split into a
    # blocked one:  perm[h*D + d] = d*H + h.
    perm = np.arange(E).reshape(D, head_num).T.reshape(-1)
    wq = w_qkv[:, :E][:, perm]
    wk = w_qkv[:, E:2 * E][:, perm]
    wv = w_qkv[:, 2 * E:][:, perm]
    bqp = b_qkv[:E][perm]
    bkp = b_qkv[E:2 * E][perm]
    bvp = b_qkv[2 * E:][perm]

    # kernel slabs: bf16 matmul weights, f32 small vectors (padded to 16 rows)
    w_slab = jnp.concatenate([wq, wk, wv, w1, w2], axis=0).astype(jnp.bfloat16)
    vec_slab = jnp.zeros((16, E), jnp.float32)
    for i, row in enumerate([bqp, bkp, bvp, g1, beta1, b1, b2, g2, beta2]):
        vec_slab = vec_slab.at[i].set(row)

    return {
        "w_slab": w_slab, "vec_slab": vec_slab,
        # raw (PyTorch-layout) parameters for the pure-JAX reference
        "w_qkv": w_qkv, "b_qkv": b_qkv, "w1": w1, "b1": b1, "w2": w2, "b2": b2,
        "g1": g1, "beta1": beta1, "g2": g2, "beta2": beta2,
    }


def init_params(key, num_layers, E, head_num):
    keys = jax.random.split(key, num_layers)
    per_layer = [_init_layer_params(k, E, head_num) for k in keys]
    return {name: jnp.stack([p[name] for p in per_layer])
            for name in per_layer[0]}


# ---------------- pure-JAX reference (mirrors the PyTorch code, f32) --------

def _ref_layernorm(x, g, b, eps):
    mu = jnp.mean(x, axis=-1, keepdims=True)
    var = jnp.mean(jnp.square(x - mu), axis=-1, keepdims=True)
    return (x - mu) * jax.lax.rsqrt(var + eps) * g + b


def reference_forward(x, params, head_num, eps=1e-5):
    B, S, E = x.shape
    H = head_num
    D = E // H
    L = params["w_qkv"].shape[0]
    for l in range(L):
        qkv = x @ params["w_qkv"][l] + params["b_qkv"][l]
        q, k, v = jnp.split(qkv, 3, axis=-1)
        mq = q.reshape(B, S, D, H).transpose(0, 3, 1, 2)
        mk = k.reshape(B, S, D, H).transpose(0, 3, 1, 2)
        mv = v.reshape(B, S, D, H).transpose(0, 3, 1, 2)
        s = jnp.einsum('bhqd,bhkd->bhqk', mq, mk) / math.sqrt(D)
        pa = jax.nn.softmax(s, axis=-1)
        o = jnp.einsum('bhqk,bhkv->bhqv', pa, mv)
        attn = o.transpose(0, 2, 1, 3).reshape(B, S, E)
        y1 = _ref_layernorm(x + attn, params["g1"][l], params["beta1"][l], eps)
        f = jnp.maximum(y1 @ params["w1"][l] + params["b1"][l], 0.0)
        f = f @ params["w2"][l] + params["b2"][l]
        x = _ref_layernorm(y1 + f, params["g2"][l], params["beta2"][l], eps)
    return x


if __name__ == "__main__":
    B, S, E, H = 2, 8, 32, 4       # small shapes consistent with the module
    num_layers = 2

    key = jax.random.PRNGKey(0)
    kx, kp = jax.random.split(key)
    x = jax.random.normal(kx, (B, S, E), jnp.float32)
    params = init_params(kp, num_layers, E, H)

    out = encoder_forward(x, params, H, batch_tile=1)
    out = jax.block_until_ready(out)

    ref = reference_forward(x, params, H)
    # bf16 MXU inputs (per the perf review) => relaxed tolerance vs. f32 reference.
    np.testing.assert_allclose(np.asarray(out), np.asarray(ref),
                               rtol=5e-2, atol=5e-2)
    print("KERNEL_OK")
</pallas_src>

<mosaic_0001>
module attributes {stable_mosaic.version = 11 : i64} {
  func.func @_encoder_kernel(%arg0: i32, %arg1: i32, %arg2: memref<8x32xf32, #tpu.memory_space<vmem>>, %arg3: memref<1x160x32xbf16, #tpu.memory_space<vmem>>, %arg4: memref<1x16x32xf32, #tpu.memory_space<vmem>>, %arg5: memref<8x32xf32, #tpu.memory_space<vmem>>, %arg6: memref<8x32xf32, #tpu.memory_space<vmem>>) attributes {dimension_semantics = [#tpu.dimension_semantics<parallel>, #tpu.dimension_semantics<arbitrary>], iteration_bounds = array<i64: 2, 2>, scalar_prefetch = 0 : i64, scratch_operands = 1 : i64, tpu.core_type = #tpu.core_type<tc>, window_params = [{transform_indices = @transform_0, window_bounds = array<i64: 8, 32>}, {transform_indices = @transform_1, window_bounds = array<i64: 1, 160, 32>}, {transform_indices = @transform_2, window_bounds = array<i64: 1, 16, 32>}, {transform_indices = @transform_3, window_bounds = array<i64: 8, 32>}]} {
    %c0_i32 = arith.constant 0 : i32
    %0 = arith.cmpi eq, %arg1, %c0_i32 : i32
    %1 = arith.extui %0 : i1 to i32
    %c0_i32_0 = arith.constant 0 : i32
    %2 = arith.cmpi ne, %1, %c0_i32_0 : i32
    scf.if %2 {
      %c0_54 = arith.constant 0 : index
      %c0_55 = arith.constant 0 : index
      %193 = vector.load %arg2[%c0_54, %c0_55] : memref<8x32xf32, #tpu.memory_space<vmem>>, vector<8x32xf32>
      %c0_56 = arith.constant 0 : index
      %c0_57 = arith.constant 0 : index
      %194 = vector.load %arg5[%c0_56, %c0_57] : memref<8x32xf32, #tpu.memory_space<vmem>>, vector<8x32xf32>
      tpu.vector_store %arg5[%c0_56, %c0_57], %193 {strides = array<i32>} : memref<8x32xf32, #tpu.memory_space<vmem>>, vector<8x32xf32>,
    } else {
    }
    %c0 = arith.constant 0 : index
    %c0_1 = arith.constant 0 : index
    %3 = vector.load %arg5[%c0, %c0_1] : memref<8x32xf32, #tpu.memory_space<vmem>>, vector<8x32xf32>
    %c0_2 = arith.constant 0 : index
    %c0_3 = arith.constant 0 : index
    %c0_4 = arith.constant 0 : index
    %4 = vector.load %arg3[%c0_2, %c0_3, %c0_4] : memref<1x160x32xbf16, #tpu.memory_space<vmem>>, vector<1x160x32xbf16>
    %5 = vector.shape_cast %4 : vector<1x160x32xbf16> to vector<160x32xbf16>
    %c0_5 = arith.constant 0 : index
    %c0_6 = arith.constant 0 : index
    %c0_7 = arith.constant 0 : index
    %6 = vector.load %arg4[%c0_5, %c0_6, %c0_7] : memref<1x16x32xf32, #tpu.memory_space<vmem>>, vector<1x16x32xf32>
    %7 = vector.shape_cast %6 : vector<1x16x32xf32> to vector<16x32xf32>
    %8 = vector.extract_strided_slice %7 {offsets = [0, 0], sizes = [1, 32], strides = [1, 1]} : vector<16x32xf32> to vector<1x32xf32>
    %9 = vector.extract_strided_slice %7 {offsets = [1, 0], sizes = [1, 32], strides = [1, 1]} : vector<16x32xf32> to vector<1x32xf32>
    %10 = vector.extract_strided_slice %7 {offsets = [2, 0], sizes = [1, 32], strides = [1, 1]} : vector<16x32xf32> to vector<1x32xf32>
    %11 = vector.extract_strided_slice %7 {offsets = [3, 0], sizes = [1, 32], strides = [1, 1]} : vector<16x32xf32> to vector<1x32xf32>
    %12 = vector.extract_strided_slice %7 {offsets = [4, 0], sizes = [1, 32], strides = [1, 1]} : vector<16x32xf32> to vector<1x32xf32>
    %13 = vector.extract_strided_slice %7 {offsets = [5, 0], sizes = [1, 32], strides = [1, 1]} : vector<16x32xf32> to vector<1x32xf32>
    %14 = vector.extract_strided_slice %7 {offsets = [6, 0], sizes = [1, 32], strides = [1, 1]} : vector<16x32xf32> to vector<1x32xf32>
    %15 = vector.extract_strided_slice %7 {offsets = [7, 0], sizes = [1, 32], strides = [1, 1]} : vector<16x32xf32> to vector<1x32xf32>
    %16 = vector.extract_strided_slice %7 {offsets = [8, 0], sizes = [1, 32], strides = [1, 1]} : vector<16x32xf32> to vector<1x32xf32>
    %17 = arith.truncf %3 : vector<8x32xf32> to vector<8x32xbf16>
    %18 = vector.extract_strided_slice %5 {offsets = [0, 0], sizes = [32, 32], strides = [1, 1]} : vector<160x32xbf16> to vector<32x32xbf16>
    %cst = arith.constant dense<0.000000e+00> : vector<8x32xf32>
    %19 = tpu.matmul %17, %18, %cst {dimension_numbers = #tpu.dot_dimension_numbers<[1], [0], [0], [1], [0, 0, 1, 1], [], []>} : vector<8x32xbf16>, vector<32x32xbf16>, vector<8x32xf32> -> vector<8x32xf32>
    %20 = vector.broadcast %8 : vector<1x32xf32> to vector<8x32xf32>
    %21 = arith.addf %19, %20 : vector<8x32xf32>
    %22 = vector.extract_strided_slice %5 {offsets = [32, 0], sizes = [32, 32], strides = [1, 1]} : vector<160x32xbf16> to vector<32x32xbf16>
    %cst_8 = arith.constant dense<0.000000e+00> : vector<8x32xf32>
    %23 = tpu.matmul %17, %22, %cst_8 {dimension_numbers = #tpu.dot_dimension_numbers<[1], [0], [0], [1], [0, 0, 1, 1], [], []>} : vector<8x32xbf16>, vector<32x32xbf16>, vector<8x32xf32> -> vector<8x32xf32>
    %24 = vector.broadcast %9 : vector<1x32xf32> to vector<8x32xf32>
    %25 = arith.addf %23, %24 : vector<8x32xf32>
    %26 = vector.extract_strided_slice %5 {offsets = [64, 0], sizes = [32, 32], strides = [1, 1]} : vector<160x32xbf16> to vector<32x32xbf16>
    %cst_9 = arith.constant dense<0.000000e+00> : vector<8x32xf32>
    %27 = tpu.matmul %17, %26, %cst_9 {dimension_numbers = #tpu.dot_dimension_numbers<[1], [0], [0], [1], [0, 0, 1, 1], [], []>} : vector<8x32xbf16>, vector<32x32xbf16>, vector<8x32xf32> -> vector<8x32xf32>
    %28 = vector.broadcast %10 : vector<1x32xf32> to vector<8x32xf32>
    %29 = arith.addf %27, %28 : vector<8x32xf32>
    %30 = vector.shape_cast %21 : vector<8x32xf32> to vector<1x8x32xf32>
    %31 = vector.shape_cast %25 : vector<8x32xf32> to vector<1x8x32xf32>
    %32 = vector.shape_cast %29 : vector<8x32xf32> to vector<1x8x32xf32>
    %33 = arith.truncf %32 : vector<1x8x32xf32> to vector<1x8x32xbf16>
    %34 = vector.extract_strided_slice %30 {offsets = [0, 0, 0], sizes = [1, 8, 8], strides = [1, 1, 1]} : vector<1x8x32xf32> to vector<1x8x8xf32>
    %35 = arith.truncf %34 : vector<1x8x8xf32> to vector<1x8x8xbf16>
    %36 = vector.extract_strided_slice %31 {offsets = [0, 0, 0], sizes = [1, 8, 8], strides = [1, 1, 1]} : vector<1x8x32xf32> to vector<1x8x8xf32>
    %37 = arith.truncf %36 : vector<1x8x8xf32> to vector<1x8x8xbf16>
    %38 = vector.extract_strided_slice %33 {offsets = [0, 0, 0], sizes = [1, 8, 8], strides = [1, 1, 1]} : vector<1x8x32xbf16> to vector<1x8x8xbf16>
    "tpu.trace_start"() <{level = 10 : i32, message = "bqd,bkd->bqk"}> : () -> ()
    %cst_10 = arith.constant dense<0.000000e+00> : vector<1x8x8xf32>
    %39 = tpu.matmul %35, %37, %cst_10 {dimension_numbers = #tpu.dot_dimension_numbers<[2], [2], [1], [1], [0, 0, 0, 1, 1, 1], [0], [0]>} : vector<1x8x8xbf16>, vector<1x8x8xbf16>, vector<1x8x8xf32> -> vector<1x8x8xf32>
    "tpu.trace_stop"() : () -> ()
    %cst_11 = arith.constant 0.353553385 : f32
    %40 = vector.broadcast %cst_11 : f32 to vector<1x8x8xf32>
    %41 = arith.mulf %39, %40 : vector<1x8x8xf32>
    %cst_12 = arith.constant dense<0xFF800000> : vector<1x8xf32>
    %42 = vector.multi_reduction <maximumf>, %41, %cst_12 [2] : vector<1x8x8xf32> to vector<1x8xf32>
    %43 = vector.shape_cast %42 : vector<1x8xf32> to vector<1x8x1xf32>
    %44 = vector.broadcast %43 : vector<1x8x1xf32> to vector<1x8x8xf32>
    %45 = arith.subf %41, %44 : vector<1x8x8xf32>
    %46 = math.exp %45 : vector<1x8x8xf32>
    %cst_13 = arith.constant dense<0.000000e+00> : vector<1x8xf32>
    %47 = vector.multi_reduction <add>, %46, %cst_13 [2] : vector<1x8x8xf32> to vector<1x8xf32>
    %48 = vector.shape_cast %47 : vector<1x8xf32> to vector<1x8x1xf32>
    %49 = tpu.reciprocal %48 {approx = true} : vector<1x8x1xf32> -> vector<1x8x1xf32>
    %50 = vector.broadcast %49 : vector<1x8x1xf32> to vector<1x8x8xf32>
    %51 = arith.mulf %46, %50 : vector<1x8x8xf32>
    %52 = arith.truncf %51 : vector<1x8x8xf32> to vector<1x8x8xbf16>
    "tpu.trace_start"() <{level = 10 : i32, message = "bqk,bkd->bqd"}> : () -> ()
    %cst_14 = arith.constant dense<0.000000e+00> : vector<1x8x8xf32>
    %53 = tpu.matmul %52, %38, %cst_14 {dimension_numbers = #tpu.dot_dimension_numbers<[2], [1], [1], [2], [0, 0, 0, 1, 1, 2], [0], [0]>} : vector<1x8x8xbf16>, vector<1x8x8xbf16>, vector<1x8x8xf32> -> vector<1x8x8xf32>
    "tpu.trace_stop"() : () -> ()
    %54 = vector.shape_cast %53 : vector<1x8x8xf32> to vector<8x8xf32>
    %55 = vector.extract_strided_slice %3 {offsets = [0, 0], sizes = [8, 8], strides = [1, 1]} : vector<8x32xf32> to vector<8x8xf32>
    %56 = arith.addf %54, %55 : vector<8x8xf32>
    %c0_15 = arith.constant 0 : index
    %c0_16 = arith.constant 0 : index
    %57 = vector.load %arg6[%c0_15, %c0_16] : memref<8x32xf32, #tpu.memory_space<vmem>>, vector<8x8xf32>
    tpu.vector_store %arg6[%c0_15, %c0_16], %56 {strides = array<i32>} : memref<8x32xf32, #tpu.memory_space<vmem>>, vector<8x8xf32>,
    %58 = vector.extract_strided_slice %30 {offsets = [0, 0, 8], sizes = [1, 8, 8], strides = [1, 1, 1]} : vector<1x8x32xf32> to vector<1x8x8xf32>
    %59 = arith.truncf %58 : vector<1x8x8xf32> to vector<1x8x8xbf16>
    %60 = vector.extract_strided_slice %31 {offsets = [0, 0, 8], sizes = [1, 8, 8], strides = [1, 1, 1]} : vector<1x8x32xf32> to vector<1x8x8xf32>
    %61 = arith.truncf %60 : vector<1x8x8xf32> to vector<1x8x8xbf16>
    %62 = vector.extract_strided_slice %33 {offsets = [0, 0, 8], sizes = [1, 8, 8], strides = [1, 1, 1]} : vector<1x8x32xbf16> to vector<1x8x8xbf16>
    "tpu.trace_start"() <{level = 10 : i32, message = "bqd,bkd->bqk"}> : () -> ()
    %cst_17 = arith.constant dense<0.000000e+00> : vector<1x8x8xf32>
    %63 = tpu.matmul %59, %61, %cst_17 {dimension_numbers = #tpu.dot_dimension_numbers<[2], [2], [1], [1], [0, 0, 0, 1, 1, 1], [0], [0]>} : vector<1x8x8xbf16>, vector<1x8x8xbf16>, vector<1x8x8xf32> -> vector<1x8x8xf32>
    "tpu.trace_stop"() : () -> ()
    %cst_18 = arith.constant 0.353553385 : f32
    %64 = vector.broadcast %cst_18 : f32 to vector<1x8x8xf32>
    %65 = arith.mulf %63, %64 : vector<1x8x8xf32>
    %cst_19 = arith.constant dense<0xFF800000> : vector<1x8xf32>
    %66 = vector.multi_reduction <maximumf>, %65, %cst_19 [2] : vector<1x8x8xf32> to vector<1x8xf32>
    %67 = vector.shape_cast %66 : vector<1x8xf32> to vector<1x8x1xf32>
    %68 = vector.broadcast %67 : vector<1x8x1xf32> to vector<1x8x8xf32>
    %69 = arith.subf %65, %68 : vector<1x8x8xf32>
    %70 = math.exp %69 : vector<1x8x8xf32>
    %cst_20 = arith.constant dense<0.000000e+00> : vector<1x8xf32>
    %71 = vector.multi_reduction <add>, %70, %cst_20 [2] : vector<1x8x8xf32> to vector<1x8xf32>
    %72 = vector.shape_cast %71 : vector<1x8xf32> to vector<1x8x1xf32>
    %73 = tpu.reciprocal %72 {approx = true} : vector<1x8x1xf32> -> vector<1x8x1xf32>
    %74 = vector.broadcast %73 : vector<1x8x1xf32> to vector<1x8x8xf32>
    %75 = arith.mulf %70, %74 : vector<1x8x8xf32>
    %76 = arith.truncf %75 : vector<1x8x8xf32> to vector<1x8x8xbf16>
    "tpu.trace_start"() <{level = 10 : i32, message = "bqk,bkd->bqd"}> : () -> ()
    %cst_21 = arith.constant dense<0.000000e+00> : vector<1x8x8xf32>
    %77 = tpu.matmul %76, %62, %cst_21 {dimension_numbers = #tpu.dot_dimension_numbers<[2], [1], [1], [2], [0, 0, 0, 1, 1, 2], [0], [0]>} : vector<1x8x8xbf16>, vector<1x8x8xbf16>, vector<1x8x8xf32> -> vector<1x8x8xf32>
    "tpu.trace_stop"() : () -> ()
    %78 = vector.shape_cast %77 : vector<1x8x8xf32> to vector<8x8xf32>
    %79 = vector.extract_strided_slice %3 {offsets = [0, 8], sizes = [8, 8], strides = [1, 1]} : vector<8x32xf32> to vector<8x8xf32>
    %80 = arith.addf %78, %79 : vector<8x8xf32>
    %c0_22 = arith.constant 0 : index
    %c8 = arith.constant 8 : index
    %81 = vector.load %arg6[%c0_22, %c8] : memref<8x32xf32, #tpu.memory_space<vmem>>, vector<8x8xf32>
    tpu.vector_store %arg6[%c0_22, %c8], %80 {strides = array<i32>} : memref<8x32xf32, #tpu.memory_space<vmem>>, vector<8x8xf32>,
    %82 = vector.extract_strided_slice %30 {offsets = [0, 0, 16], sizes = [1, 8, 8], strides = [1, 1, 1]} : vector<1x8x32xf32> to vector<1x8x8xf32>
    %83 = arith.truncf %82 : vector<1x8x8xf32> to vector<1x8x8xbf16>
    %84 = vector.extract_strided_slice %31 {offsets = [0, 0, 16], sizes = [1, 8, 8], strides = [1, 1, 1]} : vector<1x8x32xf32> to vector<1x8x8xf32>
    %85 = arith.truncf %84 : vector<1x8x8xf32> to vector<1x8x8xbf16>
    %86 = vector.extract_strided_slice %33 {offsets = [0, 0, 16], sizes = [1, 8, 8], strides = [1, 1, 1]} : vector<1x8x32xbf16> to vector<1x8x8xbf16>
    "tpu.trace_start"() <{level = 10 : i32, message = "bqd,bkd->bqk"}> : () -> ()
    %cst_23 = arith.constant dense<0.000000e+00> : vector<1x8x8xf32>
    %87 = tpu.matmul %83, %85, %cst_23 {dimension_numbers = #tpu.dot_dimension_numbers<[2], [2], [1], [1], [0, 0, 0, 1, 1, 1], [0], [0]>} : vector<1x8x8xbf16>, vector<1x8x8xbf16>, vector<1x8x8xf32> -> vector<1x8x8xf32>
    "tpu.trace_stop"() : () -> ()
    %cst_24 = arith.constant 0.353553385 : f32
    %88 = vector.broadcast %cst_24 : f32 to vector<1x8x8xf32>
    %89 = arith.mulf %87, %88 : vector<1x8x8xf32>
    %cst_25 = arith.constant dense<0xFF800000> : vector<1x8xf32>
    %90 = vector.multi_reduction <maximumf>, %89, %cst_25 [2] : vector<1x8x8xf32> to vector<1x8xf32>
    %91 = vector.shape_cast %90 : vector<1x8xf32> to vector<1x8x1xf32>
    %92 = vector.broadcast %91 : vector<1x8x1xf32> to vector<1x8x8xf32>
    %93 = arith.subf %89, %92 : vector<1x8x8xf32>
    %94 = math.exp %93 : vector<1x8x8xf32>
    %cst_26 = arith.constant dense<0.000000e+00> : vector<1x8xf32>
    %95 = vector.multi_reduction <add>, %94, %cst_26 [2] : vector<1x8x8xf32> to vector<1x8xf32>
    %96 = vector.shape_cast %95 : vector<1x8xf32> to vector<1x8x1xf32>
    %97 = tpu.reciprocal %96 {approx = true} : vector<1x8x1xf32> -> vector<1x8x1xf32>
    %98 = vector.broadcast %97 : vector<1x8x1xf32> to vector<1x8x8xf32>
    %99 = arith.mulf %94, %98 : vector<1x8x8xf32>
    %100 = arith.truncf %99 : vector<1x8x8xf32> to vector<1x8x8xbf16>
    "tpu.trace_start"() <{level = 10 : i32, message = "bqk,bkd->bqd"}> : () -> ()
    %cst_27 = arith.constant dense<0.000000e+00> : vector<1x8x8xf32>
    %101 = tpu.matmul %100, %86, %cst_27 {dimension_numbers = #tpu.dot_dimension_numbers<[2], [1], [1], [2], [0, 0, 0, 1, 1, 2], [0], [0]>} : vector<1x8x8xbf16>, vector<1x8x8xbf16>, vector<1x8x8xf32> -> vector<1x8x8xf32>
    "tpu.trace_stop"() : () -> ()
    %102 = vector.shape_cast %101 : vector<1x8x8xf32> to vector<8x8xf32>
    %103 = vector.extract_strided_slice %3 {offsets = [0, 16], sizes = [8, 8], strides = [1, 1]} : vector<8x32xf32> to vector<8x8xf32>
    %104 = arith.addf %102, %103 : vector<8x8xf32>
    %c0_28 = arith.constant 0 : index
    %c16 = arith.constant 16 : index
    %105 = vector.load %arg6[%c0_28, %c16] : memref<8x32xf32, #tpu.memory_space<vmem>>, vector<8x8xf32>
    tpu.vector_store %arg6[%c0_28, %c16], %104 {strides = array<i32>} : memref<8x32xf32, #tpu.memory_space<vmem>>, vector<8x8xf32>,
    %106 = vector.extract_strided_slice %30 {offsets = [0, 0, 24], sizes = [1, 8, 8], strides = [1, 1, 1]} : vector<1x8x32xf32> to vector<1x8x8xf32>
    %107 = arith.truncf %106 : vector<1x8x8xf32> to vector<1x8x8xbf16>
    %108 = vector.extract_strided_slice %31 {offsets = [0, 0, 24], sizes = [1, 8, 8], strides = [1, 1, 1]} : vector<1x8x32xf32> to vector<1x8x8xf32>
    %109 = arith.truncf %108 : vector<1x8x8xf32> to vector<1x8x8xbf16>
    %110 = vector.extract_strided_slice %33 {offsets = [0, 0, 24], sizes = [1, 8, 8], strides = [1, 1, 1]} : vector<1x8x32xbf16> to vector<1x8x8xbf16>
    "tpu.trace_start"() <{level = 10 : i32, message = "bqd,bkd->bqk"}> : () -> ()
    %cst_29 = arith.constant dense<0.000000e+00> : vector<1x8x8xf32>
    %111 = tpu.matmul %107, %109, %cst_29 {dimension_numbers = #tpu.dot_dimension_numbers<[2], [2], [1], [1], [0, 0, 0, 1, 1, 1], [0], [0]>} : vector<1x8x8xbf16>, vector<1x8x8xbf16>, vector<1x8x8xf32> -> vector<1x8x8xf32>
    "tpu.trace_stop"() : () -> ()
    %cst_30 = arith.constant 0.353553385 : f32
    %112 = vector.broadcast %cst_30 : f32 to vector<1x8x8xf32>
    %113 = arith.mulf %111, %112 : vector<1x8x8xf32>
    %cst_31 = arith.constant dense<0xFF800000> : vector<1x8xf32>
    %114 = vector.multi_reduction <maximumf>, %113, %cst_31 [2] : vector<1x8x8xf32> to vector<1x8xf32>
    %115 = vector.shape_cast %114 : vector<1x8xf32> to vector<1x8x1xf32>
    %116 = vector.broadcast %115 : vector<1x8x1xf32> to vector<1x8x8xf32>
    %117 = arith.subf %113, %116 : vector<1x8x8xf32>
    %118 = math.exp %117 : vector<1x8x8xf32>
    %cst_32 = arith.constant dense<0.000000e+00> : vector<1x8xf32>
    %119 = vector.multi_reduction <add>, %118, %cst_32 [2] : vector<1x8x8xf32> to vector<1x8xf32>
    %120 = vector.shape_cast %119 : vector<1x8xf32> to vector<1x8x1xf32>
    %121 = tpu.reciprocal %120 {approx = true} : vector<1x8x1xf32> -> vector<1x8x1xf32>
    %122 = vector.broadcast %121 : vector<1x8x1xf32> to vector<1x8x8xf32>
    %123 = arith.mulf %118, %122 : vector<1x8x8xf32>
    %124 = arith.truncf %123 : vector<1x8x8xf32> to vector<1x8x8xbf16>
    "tpu.trace_start"() <{level = 10 : i32, message = "bqk,bkd->bqd"}> : () -> ()
    %cst_33 = arith.constant dense<0.000000e+00> : vector<1x8x8xf32>
    %125 = tpu.matmul %124, %110, %cst_33 {dimension_numbers = #tpu.dot_dimension_numbers<[2], [1], [1], [2], [0, 0, 0, 1, 1, 2], [0], [0]>} : vector<1x8x8xbf16>, vector<1x8x8xbf16>, vector<1x8x8xf32> -> vector<1x8x8xf32>
    "tpu.trace_stop"() : () -> ()
    %126 = vector.shape_cast %125 : vector<1x8x8xf32> to vector<8x8xf32>
    %127 = vector.extract_strided_slice %3 {offsets = [0, 24], sizes = [8, 8], strides = [1, 1]} : vector<8x32xf32> to vector<8x8xf32>
    %128 = arith.addf %126, %127 : vector<8x8xf32>
    %c0_34 = arith.constant 0 : index
    %c24 = arith.constant 24 : index
    %129 = vector.load %arg6[%c0_34, %c24] : memref<8x32xf32, #tpu.memory_space<vmem>>, vector<8x8xf32>
    tpu.vector_store %arg6[%c0_34, %c24], %128 {strides = array<i32>} : memref<8x32xf32, #tpu.memory_space<vmem>>, vector<8x8xf32>,
    %c0_35 = arith.constant 0 : index
    %c0_36 = arith.constant 0 : index
    %130 = vector.load %arg6[%c0_35, %c0_36] : memref<8x32xf32, #tpu.memory_space<vmem>>, vector<8x32xf32>
    %cst_37 = arith.constant dense<0.000000e+00> : vector<8xf32>
    %131 = vector.multi_reduction <add>, %130, %cst_37 [1] : vector<8x32xf32> to vector<8xf32>
    %132 = vector.shape_cast %131 : vector<8xf32> to vector<8x1xf32>
    %cst_38 = arith.constant 3.200000e+01 : f32
    %133 = vector.broadcast %cst_38 : f32 to vector<8x1xf32>
    %134 = arith.divf %132, %133 : vector<8x1xf32>
    %135 = arith.mulf %130, %130 : vector<8x32xf32>
    %cst_39 = arith.constant dense<0.000000e+00> : vector<8xf32>
    %136 = vector.multi_reduction <add>, %135, %cst_39 [1] : vector<8x32xf32> to vector<8xf32>
    %137 = vector.shape_cast %136 : vector<8xf32> to vector<8x1xf32>
    %cst_40 = arith.constant 3.200000e+01 : f32
    %138 = vector.broadcast %cst_40 : f32 to vector<8x1xf32>
    %139 = arith.divf %137, %138 : vector<8x1xf32>
    %140 = arith.mulf %134, %134 : vector<8x1xf32>
    %141 = arith.subf %139, %140 : vector<8x1xf32>
    %cst_41 = arith.constant 0.000000e+00 : f32
    %142 = vector.broadcast %cst_41 : f32 to vector<8x1xf32>
    %143 = arith.maximumf %141, %142 : vector<8x1xf32>
    %144 = vector.broadcast %134 : vector<8x1xf32> to vector<8x32xf32>
    %145 = arith.subf %130, %144 : vector<8x32xf32>
    %cst_42 = arith.constant 9.99999974E-6 : f32
    %146 = vector.broadcast %cst_42 : f32 to vector<8x1xf32>
    %147 = arith.addf %143, %146 : vector<8x1xf32>
    %148 = math.rsqrt %147 : vector<8x1xf32>
    %149 = vector.broadcast %148 : vector<8x1xf32> to vector<8x32xf32>
    %150 = arith.mulf %145, %149 : vector<8x32xf32>
    %151 = vector.broadcast %11 : vector<1x32xf32> to vector<8x32xf32>
    %152 = arith.mulf %150, %151 : vector<8x32xf32>
    %153 = vector.broadcast %12 : vector<1x32xf32> to vector<8x32xf32>
    %154 = arith.addf %152, %153 : vector<8x32xf32>
    %155 = arith.truncf %154 : vector<8x32xf32> to vector<8x32xbf16>
    %156 = vector.extract_strided_slice %5 {offsets = [96, 0], sizes = [32, 32], strides = [1, 1]} : vector<160x32xbf16> to vector<32x32xbf16>
    %cst_43 = arith.constant dense<0.000000e+00> : vector<8x32xf32>
    %157 = tpu.matmul %155, %156, %cst_43 {dimension_numbers = #tpu.dot_dimension_numbers<[1], [0], [0], [1], [0, 0, 1, 1], [], []>} : vector<8x32xbf16>, vector<32x32xbf16>, vector<8x32xf32> -> vector<8x32xf32>
    %158 = vector.broadcast %13 : vector<1x32xf32> to vector<8x32xf32>
    %159 = arith.addf %157, %158 : vector<8x32xf32>
    %cst_44 = arith.constant 0.000000e+00 : f32
    %160 = vector.broadcast %cst_44 : f32 to vector<8x32xf32>
    %161 = arith.maximumf %159, %160 : vector<8x32xf32>
    %162 = arith.truncf %161 : vector<8x32xf32> to vector<8x32xbf16>
    %163 = vector.extract_strided_slice %5 {offsets = [128, 0], sizes = [32, 32], strides = [1, 1]} : vector<160x32xbf16> to vector<32x32xbf16>
    %cst_45 = arith.constant dense<0.000000e+00> : vector<8x32xf32>
    %164 = tpu.matmul %162, %163, %cst_45 {dimension_numbers = #tpu.dot_dimension_numbers<[1], [0], [0], [1], [0, 0, 1, 1], [], []>} : vector<8x32xbf16>, vector<32x32xbf16>, vector<8x32xf32> -> vector<8x32xf32>
    %165 = vector.broadcast %14 : vector<1x32xf32> to vector<8x32xf32>
    %166 = arith.addf %164, %165 : vector<8x32xf32>
    %167 = arith.addf %154, %166 : vector<8x32xf32>
    %cst_46 = arith.constant dense<0.000000e+00> : vector<8xf32>
    %168 = vector.multi_reduction <add>, %167, %cst_46 [1] : vector<8x32xf32> to vector<8xf32>
    %169 = vector.shape_cast %168 : vector<8xf32> to vector<8x1xf32>
    %cst_47 = arith.constant 3.200000e+01 : f32
    %170 = vector.broadcast %cst_47 : f32 to vector<8x1xf32>
    %171 = arith.divf %169, %170 : vector<8x1xf32>
    %172 = arith.mulf %167, %167 : vector<8x32xf32>
    %cst_48 = arith.constant dense<0.000000e+00> : vector<8xf32>
    %173 = vector.multi_reduction <add>, %172, %cst_48 [1] : vector<8x32xf32> to vector<8xf32>
    %174 = vector.shape_cast %173 : vector<8xf32> to vector<8x1xf32>
    %cst_49 = arith.constant 3.200000e+01 : f32
    %175 = vector.broadcast %cst_49 : f32 to vector<8x1xf32>
    %176 = arith.divf %174, %175 : vector<8x1xf32>
    %177 = arith.mulf %171, %171 : vector<8x1xf32>
    %178 = arith.subf %176, %177 : vector<8x1xf32>
    %cst_50 = arith.constant 0.000000e+00 : f32
    %179 = vector.broadcast %cst_50 : f32 to vector<8x1xf32>
    %180 = arith.maximumf %178, %179 : vector<8x1xf32>
    %181 = vector.broadcast %171 : vector<8x1xf32> to vector<8x32xf32>
    %182 = arith.subf %167, %181 : vector<8x32xf32>
    %cst_51 = arith.constant 9.99999974E-6 : f32
    %183 = vector.broadcast %cst_51 : f32 to vector<8x1xf32>
    %184 = arith.addf %180, %183 : vector<8x1xf32>
    %185 = math.rsqrt %184 : vector<8x1xf32>
    %186 = vector.broadcast %185 : vector<8x1xf32> to vector<8x32xf32>
    %187 = arith.mulf %182, %186 : vector<8x32xf32>
    %188 = vector.broadcast %15 : vector<1x32xf32> to vector<8x32xf32>
    %189 = arith.mulf %187, %188 : vector<8x32xf32>
    %190 = vector.broadcast %16 : vector<1x32xf32> to vector<8x32xf32>
    %191 = arith.addf %189, %190 : vector<8x32xf32>
    %c0_52 = arith.constant 0 : index
    %c0_53 = arith.constant 0 : index
    %192 = vector.load %arg5[%c0_52, %c0_53] : memref<8x32xf32, #tpu.memory_space<vmem>>, vector<8x32xf32>
    tpu.vector_store %arg5[%c0_52, %c0_53], %191 {strides = array<i32>} : memref<8x32xf32, #tpu.memory_space<vmem>>, vector<8x32xf32>,
    return
  }
  func.func @transform_0(%arg0: i32, %arg1: i32) -> (i32, i32) {
    %c0_i32 = arith.constant 0 : i32
    %c0_i32_0 = arith.constant 0 : i32
    return %arg0, %c0_i32 : i32, i32
  }
  func.func @transform_1(%arg0: i32, %arg1: i32) -> (i32, i32, i32) {
    %c0_i32 = arith.constant 0 : i32
    %c0_i32_0 = arith.constant 0 : i32
    %c0_i32_1 = arith.constant 0 : i32
    return %arg1, %c0_i32, %c0_i32_0 : i32, i32, i32
  }
  func.func @transform_2(%arg0: i32, %arg1: i32) -> (i32, i32, i32) {
    %c0_i32 = arith.constant 0 : i32
    %c0_i32_0 = arith.constant 0 : i32
    %c0_i32_1 = arith.constant 0 : i32
    return %arg1, %c0_i32, %c0_i32_0 : i32, i32, i32
  }
  func.func @transform_3(%arg0: i32, %arg1: i32) -> (i32, i32) {
    %c0_i32 = arith.constant 0 : i32
    %c0_i32_0 = arith.constant 0 : i32
    return %arg0, %c0_i32 : i32, i32
  }
}

</mosaic_0001>

<llo_original>
// kernel: tpu_custom_call.1
$region0: #{tpu_custom_call.1}
  #allocation0 [shape = 'u32[]', space=smem, size = 0x4, offset = 0x4, fixed_abs, tag = 'smem constant byte address 0x4 - core index']
  #allocation1 [shape = 'u32[144,128]{1,0:T(1,128)}', space=vmem, size = 0x12000, scoped, tag = 'internal scratch']
  #allocation2 [shape = 'f32[8,32]{1,0:T(8,128)}', space=vmem, size = 0x1000, scoped, tag = 'scratch operand']
  %s0 = inlined_call_operand.vmem [shape: f32[16,32], index: 0, kind: input, shape index: {}]
  %s1 = inlined_call_operand.vmem [shape: bf16[2,160,32], index: 1, kind: input, shape index: {}]
  %s2 = inlined_call_operand.vmem [shape: f32[2,16,32], index: 2, kind: input, shape index: {}]
  %s3 = inlined_call_operand.hbm [shape: f32[16,32], index: 3, kind: output, shape index: {}]
  %s4 = sld [smem:[#allocation0]]
  $region49: #{tpu_custom_call.1} parent=0
    _
  %s6 = ssub.s32 1, %s4
  %s7 = scalar_select 0, %s6, %s4
  $region1: #{tpu_custom_call.1} parent=0
    #allocation3 [shape = 'u8[8192]{0}', space=vmem, size = 0x2000, scoped, tag = 'output window, operand 0']
    #allocation4 [shape = 's32[2]{0}', space=sflag, size = 0x8, scoped, tag = 'scoped memory for tpu_custom_call.1']
    %8 = vsyncpa [#allocation4], 0
    %s9 = scalar_lea.sflag [#allocation4], 1
    %10 = vsyncpa %s9, 0
    loop: start=0, step=1, limit=6
    $region2: #{tpu_custom_call.1} parent=1 // loop_pre_header
      _
    $region3: #{tpu_custom_call.1} parent=1 // loop_header
      %s12 = sphi 0, %s16
      %p13 = scmp.ge.s32.totalorder %s12, 6
      %s19 = sphi 0, %s31
      %s20 = sphi 0, %s27
      %s21 = sphi 0, %s19
      %s22 = sphi 0, %s20
      %s23 = sphi 0, %s21
      %s24 = sphi 0, %s22
      %s34 = sphi 0, %s36
      %s37 = sphi 0, %s34
      %s38 = sphi 0, %s37
      %s54 = sphi 0, %s38
      %s60 = sphi 0, %s62
      %s63 = sphi 0, %s60
      %s64 = sphi 0, %s63
      %s80 = sphi 0, %s64
      %s86 = sphi 0, %s88
      %s89 = sphi 0, %s86
      %s90 = sphi 0, %s89
      %s106 = sphi 0, %s90
      %s112 = sphi 0, %s114
      %s115 = sphi 0, %s112
      %s116 = sphi 0, %s115
      %s132 = sphi 0, %s116
    $region4: #{tpu_custom_call.1} parent=1 // loop_header_branch
      %15 = sbr.rel (%p13) target = $region8
    $region5: #{tpu_custom_call.1} parent=1 // loop_body
      %s17 = ssub.s32 %s12, 1
      %s18 = ssub.s32 %s12, 2
      %s25 = sadd.s32 1, %s20
      %p26 = scmp.ge.s32.totalorder %s25, 2
      %s27 = scalar_select %p26, 0, %s25
      %s28 = sadd.s32 1, %s19
      %s29 = scalar_select %p26, %s28, %s19
      %p30 = scmp.ge.s32.totalorder %s29, 2
      %s31 = scalar_select %p30, 0, %s29
      %s32 = ssub.s32 %s19, %s31
      %p33 = scmp.eq.s32.totalorder %s32, 0
      %s35 = sadd.s32 %s34, 1
      %s36 = scalar_select %p33, %s34, %s35
      %p39 = pneg %p33
      %p40 = scmp.eq.s32.totalorder %s12, 3
      %p41 = por %p39, %p40
      %p42 = scmp.ne.s32.totalorder %s34, %s37
      %p43 = scmp.eq.s32.totalorder %s12, 0
      %p44 = por %p42, %p43
      %p45 = scmp.ne.s32.totalorder %s34, %s37
      %p46 = scmp.eq.s32.totalorder %s17, 3
      %p47 = por %p45, %p46
      %p48 = scmp.ne.s32.totalorder %s37, %s38
      %p49 = scmp.eq.s32.totalorder %s17, 0
      %p50 = por %p48, %p49
      %p51 = scmp.ne.s32.totalorder %s37, %s38
      %p52 = scmp.eq.s32.totalorder %s18, 3
      %p53 = por %p51, %p52
      %p55 = scmp.ne.s32.totalorder %s38, %s54
      %p56 = scmp.eq.s32.totalorder %s18, 0
      %p57 = por %p55, %p56
      %s58 = ssub.s32 %s20, %s27
      %p59 = scmp.eq.s32.totalorder %s58, 0
      %s61 = sadd.s32 %s60, 1
      %s62 = scalar_select %p59, %s60, %s61
      %p65 = pneg %p59
      %p66 = scmp.eq.s32.totalorder %s12, 3
      %p67 = por %p65, %p66
      %p68 = scmp.ne.s32.totalorder %s60, %s63
      %p69 = scmp.eq.s32.totalorder %s12, 0
      %p70 = por %p68, %p69
      %p71 = scmp.ne.s32.totalorder %s60, %s63
      %p72 = scmp.eq.s32.totalorder %s17, 3
      %p73 = por %p71, %p72
      %p74 = scmp.ne.s32.totalorder %s63, %s64
      %p75 = scmp.eq.s32.totalorder %s17, 0
      %p76 = por %p74, %p75
      %p77 = scmp.ne.s32.totalorder %s63, %s64
      %p78 = scmp.eq.s32.totalorder %s18, 3
      %p79 = por %p77, %p78
      %p81 = scmp.ne.s32.totalorder %s64, %s80
      %p82 = scmp.eq.s32.totalorder %s18, 0
      %p83 = por %p81, %p82
      %s84 = ssub.s32 %s20, %s27
      %p85 = scmp.eq.s32.totalorder %s84, 0
      %s87 = sadd.s32 %s86, 1
      %s88 = scalar_select %p85, %s86, %s87
      %p91 = pneg %p85
      %p92 = scmp.eq.s32.totalorder %s12, 3
      %p93 = por %p91, %p92
      %p94 = scmp.ne.s32.totalorder %s86, %s89
      %p95 = scmp.eq.s32.totalorder %s12, 0
      %p96 = por %p94, %p95
      %p97 = scmp.ne.s32.totalorder %s86, %s89
      %p98 = scmp.eq.s32.totalorder %s17, 3
      %p99 = por %p97, %p98
      %p100 = scmp.ne.s32.totalorder %s89, %s90
      %p101 = scmp.eq.s32.totalorder %s17, 0
      %p102 = por %p100, %p101
      %p103 = scmp.ne.s32.totalorder %s89, %s90
      %p104 = scmp.eq.s32.totalorder %s18, 3
      %p105 = por %p103, %p104
      %p107 = scmp.ne.s32.totalorder %s90, %s106
      %p108 = scmp.eq.s32.totalorder %s18, 0
      %p109 = por %p107, %p108
      %s110 = ssub.s32 %s19, %s31
      %p111 = scmp.eq.s32.totalorder %s110, 0
      %s113 = sadd.s32 %s112, 1
      %s114 = scalar_select %p111, %s112, %s113
      %p117 = pneg %p111
      %p118 = scmp.eq.s32.totalorder %s12, 3
      %p119 = por %p117, %p118
      %p120 = scmp.ne.s32.totalorder %s112, %s115
      %p121 = scmp.eq.s32.totalorder %s12, 0
      %p122 = por %p120, %p121
      %p123 = scmp.ne.s32.totalorder %s112, %s115
      %p124 = scmp.eq.s32.totalorder %s17, 3
      %p125 = por %p123, %p124
      %p126 = scmp.ne.s32.totalorder %s115, %s116
      %p127 = scmp.eq.s32.totalorder %s17, 0
      %p128 = por %p126, %p127
      %p129 = scmp.ne.s32.totalorder %s115, %s116
      %p130 = scmp.eq.s32.totalorder %s18, 3
      %p131 = por %p129, %p130
      %p133 = scmp.ne.s32.totalorder %s116, %s132
      %p134 = scmp.eq.s32.totalorder %s18, 0
      %p135 = por %p133, %p134
      %p136 = scmp.le.s32.totalorder 1, %s12
      %p137 = scmp.lt.s32.totalorder %s12, 5
      %p138 = pnand %p136, %p137
      %p139 = pneg %p138
      // Predicated region
      $region9: #{tpu_custom_call.1} parent=5 // pred_check
        _
      $region10: #{tpu_custom_call.1} parent=5 // pred_check_branch
        %141 = sbr.rel (%p138) target = $region12
      $region11: #{tpu_custom_call.1} parent=5 // pred_region
        %s142 = ssub.s32 %s12, 1
      $region12: #{tpu_custom_call.1} parent=5 // pred_fallthru
        _
      %p143 = scmp.lt.s32.totalorder %s12, 4
      // Predicated region
      $region13: #{tpu_custom_call.1} parent=5 // pred_check
        %p144 = pneg %p143
      $region14: #{tpu_custom_call.1} parent=5 // pred_check_branch
        %146 = sbr.rel (%p144) target = $region16
      $region15: #{tpu_custom_call.1} parent=5 // pred_region
        // Predicated region
        $region17: #{tpu_custom_call.1} parent=15 // pred_check
          %p147 = pneg %p44
        $region18: #{tpu_custom_call.1} parent=15 // pred_check_branch
          %149 = sbr.rel (%p147) target = $region20
        $region19: #{tpu_custom_call.1} parent=15 // pred_region
          %p150 = scmp.lt.s32.totalorder %s19, 1
          %s151 = scalar_select %p150, %s19, 1
          %s152 = smul.addr %s151, 8
          %s153 = scalar_lea.vmem %s0, %s152
        $region20: #{tpu_custom_call.1} parent=15 // pred_fallthru
          _
        // Predicated region
        $region21: #{tpu_custom_call.1} parent=15 // pred_check
          %p154 = pneg %p70
        $region22: #{tpu_custom_call.1} parent=15 // pred_check_branch
          %156 = sbr.rel (%p154) target = $region24
        $region23: #{tpu_custom_call.1} parent=15 // pred_region
          %p157 = scmp.lt.s32.totalorder %s20, 1
          %s158 = scalar_select %p157, %s20, 1
          %s159 = smul.addr %s158, 20
          %s160 = smul.addr %s159, 4
          %s161 = scalar_lea.vmem %s1, %s160
        $region24: #{tpu_custom_call.1} parent=15 // pred_fallthru
          _
        // Predicated region
        $region25: #{tpu_custom_call.1} parent=15 // pred_check
          %p162 = pneg %p96
        $region26: #{tpu_custom_call.1} parent=15 // pred_check_branch
          %164 = sbr.rel (%p162) target = $region28
        $region27: #{tpu_custom_call.1} parent=15 // pred_region
          %p165 = scmp.lt.s32.totalorder %s20, 1
          %s166 = scalar_select %p165, %s20, 1
          %s167 = smul.addr %s166, 2
          %s168 = smul.addr %s167, 8
          %s169 = scalar_lea.vmem %s2, %s168
        $region28: #{tpu_custom_call.1} parent=15 // pred_fallthru
          _
      $region16: #{tpu_custom_call.1} parent=5 // pred_fallthru
        _
      %p170 = scmp.le.s32.totalorder 1, %s12
      %p171 = scmp.lt.s32.totalorder %s12, 5
      %p172 = pnand %p170, %p171
      %p173 = pneg %p172
      // Predicated region
      $region29: #{tpu_custom_call.1} parent=5 // pred_check
        _
      $region30: #{tpu_custom_call.1} parent=5 // pred_check_branch
        %175 = sbr.rel (%p172) target = $region32
      $region31: #{tpu_custom_call.1} parent=5 // pred_region
        %s176 = ssub.s32 %s12, 1
        %p177 = scmp.lt.s32.totalorder %s21, 1
        %s178 = scalar_select %p177, %s21, 1
        %s179 = smul.addr %s178, 8
        %s180 = scalar_lea.vmem %s0, %s179
        %p181 = pneg %p50
        %p182 = pneg %p47
        %p183 = scmp.lt.s32.totalorder %s22, 1
        %s184 = scalar_select %p183, %s22, 1
        %s185 = smul.addr %s184, 20
        %s186 = smul.addr %s185, 4
        %s187 = scalar_lea.vmem %s1, %s186
        %p188 = pneg %p76
        %p189 = pneg %p73
        %p190 = scmp.lt.s32.totalorder %s22, 1
        %s191 = scalar_select %p190, %s22, 1
        %s192 = smul.addr %s191, 2
        %s193 = smul.addr %s192, 8
        %s194 = scalar_lea.vmem %s2, %s193
        %p195 = pneg %p102
        %p196 = pneg %p99
        %p197 = pneg %p128
        %p198 = pneg %p125
        %s199 = sand.u32 %s115, 1
        %s200 = scalar_lea.sflag [#allocation4], %s199
        %s201 = sand.u32 %s115, 1
        %s202 = smul.addr %s201, 8
        %s203 = scalar_lea.vmem [#allocation3], %s202
        %p204 = scmp.lt.s32.totalorder %s21, 1
        %s205 = scalar_select %p204, %s21, 1
        %s206 = smul.addr %s205, 8
        %s207 = scalar_lea.vmem %s0, %s206
        %p208 = scmp.lt.s32.totalorder %s22, 1
        %s209 = scalar_select %p208, %s22, 1
        %s210 = smul.addr %s209, 20
        %s211 = smul.addr %s210, 4
        %s212 = scalar_lea.vmem %s1, %s211
        %p213 = scmp.lt.s32.totalorder %s22, 1
        %s214 = scalar_select %p213, %s22, 1
        %s215 = smul.addr %s214, 2
        %s216 = smul.addr %s215, 8
        %s217 = scalar_lea.vmem %s2, %s216
        %p219 = scmp.eq.s32.totalorder %s22, 0
        // Predicated region
        $region33: #{tpu_custom_call.1} parent=31 // pred_check
          %p220 = pneg %p219
        $region34: #{tpu_custom_call.1} parent=31 // pred_check_branch
          %222 = sbr.rel (%p220) target = $region36
        $region35: #{tpu_custom_call.1} parent=31 // pred_region
          %v223 = vld [vmem:[%s207] sm:$0xff]
          %vm224 = vcmask 261120
          %225 = vst.msk [vmem:[%s203] sm:$0xff] %vm224, %v223
        $region36: #{tpu_custom_call.1} parent=31 // pred_fallthru
          _
        %v226 = vld [vmem:[%s203] sm:$0xff]
        %v227 = vld [vmem:[%s212] sm:$0xf]
        %v228 = vld [vmem:[%s212 + $0x4] sm:$0xf]
        %v229 = vld [vmem:[%s212 + $0x8] sm:$0xf]
        %v230 = vld [vmem:[%s212 + $0xc] sm:$0xf]
        %v231 = vld [vmem:[%s212 + $0x10] sm:$0xf]
        %v232 = vld [vmem:[%s212 + $0x14] sm:$0xf]
        %v233 = vld [vmem:[%s212 + $0x18] sm:$0xf]
        %v234 = vld [vmem:[%s212 + $0x1c] sm:$0xf]
        %v235 = vld [vmem:[%s212 + $0x20] sm:$0xf]
        %v236 = vld [vmem:[%s212 + $0x24] sm:$0xf]
        %v237 = vld [vmem:[%s212 + $0x28] sm:$0xf]
        %v238 = vld [vmem:[%s212 + $0x2c] sm:$0xf]
        %v239 = vld [vmem:[%s212 + $0x30] sm:$0xf]
        %v240 = vld [vmem:[%s212 + $0x34] sm:$0xf]
        %v241 = vld [vmem:[%s212 + $0x38] sm:$0xf]
        %v242 = vld [vmem:[%s212 + $0x3c] sm:$0xf]
        %v243 = vld [vmem:[%s212 + $0x40] sm:$0xf]
        %v244 = vld [vmem:[%s212 + $0x44] sm:$0xf]
        %v245 = vld [vmem:[%s212 + $0x48] sm:$0xf]
        %v246 = vld [vmem:[%s212 + $0x4c] sm:$0xf]
        %v247 = vld [vmem:[%s217] sm:$0xff]
        %v248 = vld [vmem:[%s217 + $0x8] sm:$0xff]
        %v249 = vpack.c.bf16 %v226, %v226
        %v250 = vlaneseq
        %v251 = vshrl.u32 %v250, 7
        %v252 = vsub.s32 0, %v251
        %v253 = vrot.slane %v247, %v252
        %v258 = vunpack.c.l.b16 %v227
        %v259 = vunpack.c.l.b16 %v228
        %v260 = vunpack.c.l.b16 %v229
        %v261 = vunpack.c.l.b16 %v230
        %v262 = vpack.c.b16 %v259, %v258
        %v263 = vpack.c.b16 %v261, %v260
        %vm266 = vcmask 261120
        %v268 = vsel %vm266, %v249, 0
        %270 = vmatprep.subr.bf16.mxu0 0
        %271 = vmatpush1.bf16.msra.mxu0 %v262
        %272 = vmatprep.subr.bf16.mxu0 0
        %273 = vmatpush1.bf16.msra.mxu0 %v263
        %274 = vmatprep.subr.bf16.mxu0 0
        %275 = vmatpush1.bf16.msra.mxu0 0
        %276 = vmatprep.subr.bf16.mxu0 0
        %277 = vmatpush1.bf16.msra.mxu0 0
        %278 = vmatprep.subr.bf16.mxu0 0
        %279 = vmatpush1.bf16.msra.mxu0 0
        %280 = vmatprep.subr.bf16.mxu0 0
        %281 = vmatpush1.bf16.msra.mxu0 0
        %282 = vmatprep.subr.bf16.mxu0 0
        %283 = vmatpush1.bf16.msra.mxu0 0
        %284 = vmatprep.subr.bf16.mxu0 0
        %285 = vmatpush1.bf16.msra.mxu0 0
        %286 = vmatprep.subr.bf16.mxu0 0
        %287 = vmatpush1.bf16.msra.mxu0 0
        %288 = vmatprep.subr.bf16.mxu0 0
        %289 = vmatpush1.bf16.msra.mxu0 0
        %290 = vmatprep.subr.bf16.mxu0 0
        %291 = vmatpush1.bf16.msra.mxu0 0
        %292 = vmatprep.subr.bf16.mxu0 0
        %293 = vmatpush1.bf16.msra.mxu0 0
        %294 = vmatprep.subr.bf16.mxu0 0
        %295 = vmatpush1.bf16.msra.mxu0 0
        %296 = vmatprep.subr.bf16.mxu0 0
        %297 = vmatpush1.bf16.msra.mxu0 0
        %298 = vmatprep.subr.bf16.mxu0 0
        %299 = vmatpush1.bf16.msra.mxu0 0
        %300 = vmatprep.subr.bf16.mxu0 0
        %301 = vmatpush1.bf16.msra.mxu0 0
        %302 = vmatprep.mubr.bf16.mxu0 0
        %303 = vmatmul.mubr.bf16.gmra.mrb[0].mxu0 %v268
        %v304 = vpop.f32.mrb[0].mxu0
        %v305 = vadd.f32 %v253, %v304
        %v306 = vpop.f32.mrb[0].mxu0
        %v307 = vpop.f32.mrb[0].mxu0
        %v308 = vpop.f32.mrb[0].mxu0
        %309 = vdwg.mxu0
        %v310 = vlaneseq
        %v311 = vshrl.u32 %v310, 7
        %v312 = vsub.s32 1, %v311
        %v313 = vrot.slane %v247, %v312
        %v318 = vunpack.c.l.b16 %v231
        %v319 = vunpack.c.l.b16 %v232
        %v320 = vunpack.c.l.b16 %v233
        %v321 = vunpack.c.l.b16 %v234
        %v322 = vpack.c.b16 %v319, %v318
        %v323 = vpack.c.b16 %v321, %v320
        %326 = vmatprep.subr.bf16.mxu0 0
        %327 = vmatpush1.bf16.msra.mxu0 %v322
        %328 = vmatprep.subr.bf16.mxu0 0
        %329 = vmatpush1.bf16.msra.mxu0 %v323
        %330 = vmatprep.subr.bf16.mxu0 0
        %331 = vmatpush1.bf16.msra.mxu0 0
        %332 = vmatprep.subr.bf16.mxu0 0
        %333 = vmatpush1.bf16.msra.mxu0 0
        %334 = vmatprep.subr.bf16.mxu0 0
        %335 = vmatpush1.bf16.msra.mxu0 0
        %336 = vmatprep.subr.bf16.mxu0 0
        %337 = vmatpush1.bf16.msra.mxu0 0
        %338 = vmatprep.subr.bf16.mxu0 0
        %339 = vmatpush1.bf16.msra.mxu0 0
        %340 = vmatprep.subr.bf16.mxu0 0
        %341 = vmatpush1.bf16.msra.mxu0 0
        %342 = vmatprep.subr.bf16.mxu0 0
        %343 = vmatpush1.bf16.msra.mxu0 0
        %344 = vmatprep.subr.bf16.mxu0 0
        %345 = vmatpush1.bf16.msra.mxu0 0
        %346 = vmatprep.subr.bf16.mxu0 0
        %347 = vmatpush1.bf16.msra.mxu0 0
        %348 = vmatprep.subr.bf16.mxu0 0
        %349 = vmatpush1.bf16.msra.mxu0 0
        %350 = vmatprep.subr.bf16.mxu0 0
        %351 = vmatpush1.bf16.msra.mxu0 0
        %352 = vmatprep.subr.bf16.mxu0 0
        %353 = vmatpush1.bf16.msra.mxu0 0
        %354 = vmatprep.subr.bf16.mxu0 0
        %355 = vmatpush1.bf16.msra.mxu0 0
        %356 = vmatprep.subr.bf16.mxu0 0
        %357 = vmatpush1.bf16.msra.mxu0 0
        %358 = vmatprep.mubr.bf16.mxu0 0
        %359 = vmatmul.mubr.bf16.gmra.mrb[0].mxu0 %v268
        %v360 = vpop.f32.mrb[0].mxu0
        %v361 = vadd.f32 %v313, %v360
        %v362 = vpop.f32.mrb[0].mxu0
        %v363 = vpop.f32.mrb[0].mxu0
        %v364 = vpop.f32.mrb[0].mxu0
        %365 = vdwg.mxu0
        %v366 = vlaneseq
        %v367 = vshrl.u32 %v366, 7
        %v368 = vsub.s32 2, %v367
        %v369 = vrot.slane %v247, %v368
        %v374 = vunpack.c.l.b16 %v235
        %v375 = vunpack.c.l.b16 %v236
        %v376 = vunpack.c.l.b16 %v237
        %v377 = vunpack.c.l.b16 %v238
        %v378 = vpack.c.b16 %v375, %v374
        %v379 = vpack.c.b16 %v377, %v376
        %382 = vmatprep.subr.bf16.mxu0 0
        %383 = vmatpush1.bf16.msra.mxu0 %v378
        %384 = vmatprep.subr.bf16.mxu0 0
        %385 = vmatpush1.bf16.msra.mxu0 %v379
        %386 = vmatprep.subr.bf16.mxu0 0
        %387 = vmatpush1.bf16.msra.mxu0 0
        %388 = vmatprep.subr.bf16.mxu0 0
        %389 = vmatpush1.bf16.msra.mxu0 0
        %390 = vmatprep.subr.bf16.mxu0 0
        %391 = vmatpush1.bf16.msra.mxu0 0
        %392 = vmatprep.subr.bf16.mxu0 0
        %393 = vmatpush1.bf16.msra.mxu0 0
        %394 = vmatprep.subr.bf16.mxu0 0
        %395 = vmatpush1.bf16.msra.mxu0 0
        %396 = vmatprep.subr.bf16.mxu0 0
        %397 = vmatpush1.bf16.msra.mxu0 0
        %398 = vmatprep.subr.bf16.mxu0 0
        %399 = vmatpush1.bf16.msra.mxu0 0
        %400 = vmatprep.subr.bf16.mxu0 0
        %401 = vmatpush1.bf16.msra.mxu0 0
        %402 = vmatprep.subr.bf16.mxu0 0
        %403 = vmatpush1.bf16.msra.mxu0 0
        %404 = vmatprep.subr.bf16.mxu0 0
        %405 = vmatpush1.bf16.msra.mxu0 0
        %406 = vmatprep.subr.bf16.mxu0 0
        %407 = vmatpush1.bf16.msra.mxu0 0
        %408 = vmatprep.subr.bf16.mxu0 0
        %409 = vmatpush1.bf16.msra.mxu0 0
        %410 = vmatprep.subr.bf16.mxu0 0
        %411 = vmatpush1.bf16.msra.mxu0 0
        %412 = vmatprep.subr.bf16.mxu0 0
        %413 = vmatpush1.bf16.msra.mxu0 0
        %414 = vmatprep.mubr.bf16.mxu0 0
        %415 = vmatmul.mubr.bf16.gmra.mrb[0].mxu0 %v268
        %v416 = vpop.f32.mrb[0].mxu0
        %v417 = vadd.f32 %v369, %v416
        %v418 = vpop.f32.mrb[0].mxu0
        %v419 = vpop.f32.mrb[0].mxu0
        %v420 = vpop.f32.mrb[0].mxu0
        %421 = vdwg.mxu0
        %v422 = vpack.c.bf16 %v417, %v417
        %v423 = vpack.c.bf16 %v305, %v305
        %v424 = vpack.c.bf16 %v361, %v361
        %vm425 = vcmask 64512
        %v427 = vsel %vm425, %v423, 0
        %v430 = vsel %vm425, %v424, 0
        %432 = vmatprep.subr.bf16.mxu0 0
        %433 = vmatpush1.bf16.xpose.msra.mxu0 %v430
        %434 = vmatprep.subr.bf16.mxu0 0
        %435 = vmatpush1.bf16.xpose.msra.mxu0 0
        %436 = vmatprep.subr.bf16.mxu0 0
        %437 = vmatpush1.bf16.xpose.msra.mxu0 0
        %438 = vmatprep.subr.bf16.mxu0 0
        %439 = vmatpush1.bf16.xpose.msra.mxu0 0
        %440 = vmatprep.subr.bf16.mxu0 0
        %441 = vmatpush1.bf16.xpose.msra.mxu0 0
        %442 = vmatprep.subr.bf16.mxu0 0
        %443 = vmatpush1.bf16.xpose.msra.mxu0 0
        %444 = vmatprep.subr.bf16.mxu0 0
        %445 = vmatpush1.bf16.xpose.msra.mxu0 0
        %446 = vmatprep.subr.bf16.mxu0 0
        %447 = vmatpush1.bf16.xpose.msra.mxu0 0
        %448 = vmatprep.subr.bf16.mxu0 0
        %449 = vmatpush1.bf16.xpose.msra.mxu0 0
        %450 = vmatprep.subr.bf16.mxu0 0
        %451 = vmatpush1.bf16.xpose.msra.mxu0 0
        %452 = vmatprep.subr.bf16.mxu0 0
        %453 = vmatpush1.bf16.xpose.msra.mxu0 0
        %454 = vmatprep.subr.bf16.mxu0 0
        %455 = vmatpush1.bf16.xpose.msra.mxu0 0
        %456 = vmatprep.subr.bf16.mxu0 0
        %457 = vmatpush1.bf16.xpose.msra.mxu0 0
        %458 = vmatprep.subr.bf16.mxu0 0
        %459 = vmatpush1.bf16.xpose.msra.mxu0 0
        %460 = vmatprep.subr.bf16.mxu0 0
        %461 = vmatpush1.bf16.xpose.msra.mxu0 0
        %462 = vmatprep.subr.bf16.mxu0 0
        %463 = vmatpush1.bf16.xpose.msra.mxu0 0
        %464 = vmatprep.mubr.bf16.mxu0 0
        %465 = vmatmul.mubr.bf16.gmra.mrb[0].mxu0 %v427
        %v466 = vpop.f32.mrb[0].mxu0
        %v467 = vadd.f32 0.0, %v466
        %v468 = vpop.f32.mrb[0].mxu0
        %v469 = vpop.f32.mrb[0].mxu0
        %v470 = vpop.f32.mrb[0].mxu0
        %471 = vdwg.mxu0
        %v472 = vmul.f32 %v467, 0.35355338
        %v473 = vsel %vm425, %v472, -inf
        %474 = vmax.xlane.f32.xlu0 %v473
        %v475 = vpop.xlane.xlu0 %474
        %v476 = vsub.f32 %v472, %v475
        %v477 = vmul.f32 %v476, 1.442695
        %v478 = vpow.pop %v477
        %v479 = vsel %vm425, %v478, 0.0
        %480 = vadd.xlane.f32.xlu0 %v479
        %v481 = vpop.xlane.xlu0 %480
        %v482 = vrcp.pop %v481
        %v483 = vmul.f32 %v478, %v482
        %v484 = vpack.c.bf16 %v483, %v483
        %v486 = vsel %vm425, %v484, 0
        %vm488 = vcmask 1043456
        %v490 = vsel %vm488, %v422, 0
        %492 = vmatprep.subr.bf16.mxu0 0
        %493 = vmatpush1.bf16.msra.mxu0 %v490
        %494 = vmatprep.subr.bf16.mxu0 0
        %495 = vmatpush1.bf16.msra.mxu0 0
        %496 = vmatprep.subr.bf16.mxu0 0
        %497 = vmatpush1.bf16.msra.mxu0 0
        %498 = vmatprep.subr.bf16.mxu0 0
        %499 = vmatpush1.bf16.msra.mxu0 0
        %500 = vmatprep.subr.bf16.mxu0 0
        %501 = vmatpush1.bf16.msra.mxu0 0
        %502 = vmatprep.subr.bf16.mxu0 0
        %503 = vmatpush1.bf16.msra.mxu0 0
        %504 = vmatprep.subr.bf16.mxu0 0
        %505 = vmatpush1.bf16.msra.mxu0 0
        %506 = vmatprep.subr.bf16.mxu0 0
        %507 = vmatpush1.bf16.msra.mxu0 0
        %508 = vmatprep.subr.bf16.mxu0 0
        %509 = vmatpush1.bf16.msra.mxu0 0
        %510 = vmatprep.subr.bf16.mxu0 0
        %511 = vmatpush1.bf16.msra.mxu0 0
        %512 = vmatprep.subr.bf16.mxu0 0
        %513 = vmatpush1.bf16.msra.mxu0 0
        %514 = vmatprep.subr.bf16.mxu0 0
        %515 = vmatpush1.bf16.msra.mxu0 0
        %516 = vmatprep.subr.bf16.mxu0 0
        %517 = vmatpush1.bf16.msra.mxu0 0
        %518 = vmatprep.subr.bf16.mxu0 0
        %519 = vmatpush1.bf16.msra.mxu0 0
        %520 = vmatprep.subr.bf16.mxu0 0
        %521 = vmatpush1.bf16.msra.mxu0 0
        %522 = vmatprep.subr.bf16.mxu0 0
        %523 = vmatpush1.bf16.msra.mxu0 0
        %524 = vmatprep.mubr.bf16.mxu0 0
        %525 = vmatmul.mubr.bf16.gmra.mrb[0].mxu0 %v486
        %v526 = vpop.f32.mrb[0].mxu0
        %v527 = vadd.f32 %v226, %v526
        %v528 = vpop.f32.mrb[0].mxu0
        %v529 = vpop.f32.mrb[0].mxu0
        %v530 = vpop.f32.mrb[0].mxu0
        %531 = vdwg.mxu0
        %532 = vst.msk [vmem:[#allocation2] sm:$0xff] %vm425, %v527
        %534 = vrot.lane.b32.xlu0 %v423, 120
        %v535 = vpop.permute.xlu0 %534
        %537 = vrot.lane.b32.xlu0 %v424, 120
        %v538 = vpop.permute.xlu0 %537
        %v540 = vsel %vm425, %v535, 0
        %v543 = vsel %vm425, %v538, 0
        %545 = vmatprep.subr.bf16.mxu0 0
        %546 = vmatpush1.bf16.xpose.msra.mxu0 %v543
        %547 = vmatprep.subr.bf16.mxu0 0
        %548 = vmatpush1.bf16.xpose.msra.mxu0 0
        %549 = vmatprep.subr.bf16.mxu0 0
        %550 = vmatpush1.bf16.xpose.msra.mxu0 0
        %551 = vmatprep.subr.bf16.mxu0 0
        %552 = vmatpush1.bf16.xpose.msra.mxu0 0
        %553 = vmatprep.subr.bf16.mxu0 0
        %554 = vmatpush1.bf16.xpose.msra.mxu0 0
        %555 = vmatprep.subr.bf16.mxu0 0
        %556 = vmatpush1.bf16.xpose.msra.mxu0 0
        %557 = vmatprep.subr.bf16.mxu0 0
        %558 = vmatpush1.bf16.xpose.msra.mxu0 0
        %559 = vmatprep.subr.bf16.mxu0 0
        %560 = vmatpush1.bf16.xpose.msra.mxu0 0
        %561 = vmatprep.subr.bf16.mxu0 0
        %562 = vmatpush1.bf16.xpose.msra.mxu0 0
        %563 = vmatprep.subr.bf16.mxu0 0
        %564 = vmatpush1.bf16.xpose.msra.mxu0 0
        %565 = vmatprep.subr.bf16.mxu0 0
        %566 = vmatpush1.bf16.xpose.msra.mxu0 0
        %567 = vmatprep.subr.bf16.mxu0 0
        %568 = vmatpush1.bf16.xpose.msra.mxu0 0
        %569 = vmatprep.subr.bf16.mxu0 0
        %570 = vmatpush1.bf16.xpose.msra.mxu0 0
        %571 = vmatprep.subr.bf16.mxu0 0
        %572 = vmatpush1.bf16.xpose.msra.mxu0 0
        %573 = vmatprep.subr.bf16.mxu0 0
        %574 = vmatpush1.bf16.xpose.msra.mxu0 0
        %575 = vmatprep.subr.bf16.mxu0 0
        %576 = vmatpush1.bf16.xpose.msra.mxu0 0
        %577 = vmatprep.mubr.bf16.mxu0 0
        %578 = vmatmul.mubr.bf16.gmra.mrb[0].mxu0 %v540
        %v579 = vpop.f32.mrb[0].mxu0
        %v580 = vadd.f32 0.0, %v579
        %v581 = vpop.f32.mrb[0].mxu0
        %v582 = vpop.f32.mrb[0].mxu0
        %v583 = vpop.f32.mrb[0].mxu0
        %584 = vdwg.mxu0
        %v585 = vmul.f32 %v580, 0.35355338
        %v586 = vsel %vm425, %v585, -inf
        %587 = vmax.xlane.f32.xlu0 %v586
        %v588 = vpop.xlane.xlu0 %587
        %v589 = vsub.f32 %v585, %v588
        %v590 = vmul.f32 %v589, 1.442695
        %v591 = vpow.pop %v590
        %v592 = vsel %vm425, %v591, 0.0
        %593 = vadd.xlane.f32.xlu0 %v592
        %v594 = vpop.xlane.xlu0 %593
        %v595 = vrcp.pop %v594
        %v596 = vmul.f32 %v591, %v595
        %v597 = vpack.c.bf16 %v596, %v596
        %599 = vrot.lane.b32.xlu0 %v422, 120
        %v600 = vpop.permute.xlu0 %599
        %602 = vrot.lane.b32.xlu0 %v226, 120
        %v603 = vpop.permute.xlu0 %602
        %v606 = vsel %vm425, %v597, 0
        %v609 = vsel %vm488, %v600, 0
        %611 = vmatprep.subr.bf16.mxu0 0
        %612 = vmatpush1.bf16.msra.mxu0 %v609
        %613 = vmatprep.subr.bf16.mxu0 0
        %614 = vmatpush1.bf16.msra.mxu0 0
        %615 = vmatprep.subr.bf16.mxu0 0
        %616 = vmatpush1.bf16.msra.mxu0 0
        %617 = vmatprep.subr.bf16.mxu0 0
        %618 = vmatpush1.bf16.msra.mxu0 0
        %619 = vmatprep.subr.bf16.mxu0 0
        %620 = vmatpush1.bf16.msra.mxu0 0
        %621 = vmatprep.subr.bf16.mxu0 0
        %622 = vmatpush1.bf16.msra.mxu0 0
        %623 = vmatprep.subr.bf16.mxu0 0
        %624 = vmatpush1.bf16.msra.mxu0 0
        %625 = vmatprep.subr.bf16.mxu0 0
        %626 = vmatpush1.bf16.msra.mxu0 0
        %627 = vmatprep.subr.bf16.mxu0 0
        %628 = vmatpush1.bf16.msra.mxu0 0
        %629 = vmatprep.subr.bf16.mxu0 0
        %630 = vmatpush1.bf16.msra.mxu0 0
        %631 = vmatprep.subr.bf16.mxu0 0
        %632 = vmatpush1.bf16.msra.mxu0 0
        %633 = vmatprep.subr.bf16.mxu0 0
        %634 = vmatpush1.bf16.msra.mxu0 0
        %635 = vmatprep.subr.bf16.mxu0 0
        %636 = vmatpush1.bf16.msra.mxu0 0
        %637 = vmatprep.subr.bf16.mxu0 0
        %638 = vmatpush1.bf16.msra.mxu0 0
        %639 = vmatprep.subr.bf16.mxu0 0
        %640 = vmatpush1.bf16.msra.mxu0 0
        %641 = vmatprep.subr.bf16.mxu0 0
        %642 = vmatpush1.bf16.msra.mxu0 0
        %643 = vmatprep.mubr.bf16.mxu0 0
        %644 = vmatmul.mubr.bf16.gmra.mrb[0].mxu0 %v606
        %v645 = vpop.f32.mrb[0].mxu0
        %v646 = vadd.f32 %v603, %v645
        %v647 = vpop.f32.mrb[0].mxu0
        %v648 = vpop.f32.mrb[0].mxu0
        %v649 = vpop.f32.mrb[0].mxu0
        %650 = vdwg.mxu0
        %652 = vrot.lane.b32.xlu0 %v646, 8
        %v653 = vpop.permute.xlu0 %652
        %vm655 = vcmask 130112
        %656 = vst.msk [vmem:[#allocation2] sm:$0xff] %vm655, %v653
        %657 = vrot.lane.b32.xlu0 %v423, 112
        %v658 = vpop.permute.xlu0 %657
        %659 = vrot.lane.b32.xlu0 %v424, 112
        %v660 = vpop.permute.xlu0 %659
        %v662 = vsel %vm425, %v658, 0
        %v665 = vsel %vm425, %v660, 0
        %667 = vmatprep.subr.bf16.mxu0 0
        %668 = vmatpush1.bf16.xpose.msra.mxu0 %v665
        %669 = vmatprep.subr.bf16.mxu0 0
        %670 = vmatpush1.bf16.xpose.msra.mxu0 0
        %671 = vmatprep.subr.bf16.mxu0 0
        %672 = vmatpush1.bf16.xpose.msra.mxu0 0
        %673 = vmatprep.subr.bf16.mxu0 0
        %674 = vmatpush1.bf16.xpose.msra.mxu0 0
        %675 = vmatprep.subr.bf16.mxu0 0
        %676 = vmatpush1.bf16.xpose.msra.mxu0 0
        %677 = vmatprep.subr.bf16.mxu0 0
        %678 = vmatpush1.bf16.xpose.msra.mxu0 0
        %679 = vmatprep.subr.bf16.mxu0 0
        %680 = vmatpush1.bf16.xpose.msra.mxu0 0
        %681 = vmatprep.subr.bf16.mxu0 0
        %682 = vmatpush1.bf16.xpose.msra.mxu0 0
        %683 = vmatprep.subr.bf16.mxu0 0
        %684 = vmatpush1.bf16.xpose.msra.mxu0 0
        %685 = vmatprep.subr.bf16.mxu0 0
        %686 = vmatpush1.bf16.xpose.msra.mxu0 0
        %687 = vmatprep.subr.bf16.mxu0 0
        %688 = vmatpush1.bf16.xpose.msra.mxu0 0
        %689 = vmatprep.subr.bf16.mxu0 0
        %690 = vmatpush1.bf16.xpose.msra.mxu0 0
        %691 = vmatprep.subr.bf16.mxu0 0
        %692 = vmatpush1.bf16.xpose.msra.mxu0 0
        %693 = vmatprep.subr.bf16.mxu0 0
        %694 = vmatpush1.bf16.xpose.msra.mxu0 0
        %695 = vmatprep.subr.bf16.mxu0 0
        %696 = vmatpush1.bf16.xpose.msra.mxu0 0
        %697 = vmatprep.subr.bf16.mxu0 0
        %698 = vmatpush1.bf16.xpose.msra.mxu0 0
        %699 = vmatprep.mubr.bf16.mxu0 0
        %700 = vmatmul.mubr.bf16.gmra.mrb[0].mxu0 %v662
        %v701 = vpop.f32.mrb[0].mxu0
        %v702 = vadd.f32 0.0, %v701
        %v703 = vpop.f32.mrb[0].mxu0
        %v704 = vpop.f32.mrb[0].mxu0
        %v705 = vpop.f32.mrb[0].mxu0
        %706 = vdwg.mxu0
        %v707 = vmul.f32 %v702, 0.35355338
        %v708 = vsel %vm425, %v707, -inf
        %709 = vmax.xlane.f32.xlu0 %v708
        %v710 = vpop.xlane.xlu0 %709
        %v711 = vsub.f32 %v707, %v710
        %v712 = vmul.f32 %v711, 1.442695
        %v713 = vpow.pop %v712
        %v714 = vsel %vm425, %v713, 0.0
        %715 = vadd.xlane.f32.xlu0 %v714
        %v716 = vpop.xlane.xlu0 %715
        %v717 = vrcp.pop %v716
        %v718 = vmul.f32 %v713, %v717
        %v719 = vpack.c.bf16 %v718, %v718
        %720 = vrot.lane.b32.xlu0 %v422, 112
        %v721 = vpop.permute.xlu0 %720
        %722 = vrot.lane.b32.xlu0 %v226, 112
        %v723 = vpop.permute.xlu0 %722
        %v726 = vsel %vm425, %v719, 0
        %v729 = vsel %vm488, %v721, 0
        %731 = vmatprep.subr.bf16.mxu0 0
        %732 = vmatpush1.bf16.msra.mxu0 %v729
        %733 = vmatprep.subr.bf16.mxu0 0
        %734 = vmatpush1.bf16.msra.mxu0 0
        %735 = vmatprep.subr.bf16.mxu0 0
        %736 = vmatpush1.bf16.msra.mxu0 0
        %737 = vmatprep.subr.bf16.mxu0 0
        %738 = vmatpush1.bf16.msra.mxu0 0
        %739 = vmatprep.subr.bf16.mxu0 0
        %740 = vmatpush1.bf16.msra.mxu0 0
        %741 = vmatprep.subr.bf16.mxu0 0
        %742 = vmatpush1.bf16.msra.mxu0 0
        %743 = vmatprep.subr.bf16.mxu0 0
        %744 = vmatpush1.bf16.msra.mxu0 0
        %745 = vmatprep.subr.bf16.mxu0 0
        %746 = vmatpush1.bf16.msra.mxu0 0
        %747 = vmatprep.subr.bf16.mxu0 0
        %748 = vmatpush1.bf16.msra.mxu0 0
        %749 = vmatprep.subr.bf16.mxu0 0
        %750 = vmatpush1.bf16.msra.mxu0 0
        %751 = vmatprep.subr.bf16.mxu0 0
        %752 = vmatpush1.bf16.msra.mxu0 0
        %753 = vmatprep.subr.bf16.mxu0 0
        %754 = vmatpush1.bf16.msra.mxu0 0
        %755 = vmatprep.subr.bf16.mxu0 0
        %756 = vmatpush1.bf16.msra.mxu0 0
        %757 = vmatprep.subr.bf16.mxu0 0
        %758 = vmatpush1.bf16.msra.mxu0 0
        %759 = vmatprep.subr.bf16.mxu0 0
        %760 = vmatpush1.bf16.msra.mxu0 0
        %761 = vmatprep.subr.bf16.mxu0 0
        %762 = vmatpush1.bf16.msra.mxu0 0
        %763 = vmatprep.mubr.bf16.mxu0 0
        %764 = vmatmul.mubr.bf16.gmra.mrb[0].mxu0 %v726
        %v765 = vpop.f32.mrb[0].mxu0
        %v766 = vadd.f32 %v723, %v765
        %v767 = vpop.f32.mrb[0].mxu0
        %v768 = vpop.f32.mrb[0].mxu0
        %v769 = vpop.f32.mrb[0].mxu0
        %770 = vdwg.mxu0
        %772 = vrot.lane.b32.xlu0 %v766, 16
        %v773 = vpop.permute.xlu0 %772
        %vm775 = vcmask 195712
        %776 = vst.msk [vmem:[#allocation2] sm:$0xff] %vm775, %v773
        %777 = vrot.lane.b32.xlu0 %v423, 104
        %v778 = vpop.permute.xlu0 %777
        %779 = vrot.lane.b32.xlu0 %v424, 104
        %v780 = vpop.permute.xlu0 %779
        %v782 = vsel %vm425, %v778, 0
        %v785 = vsel %vm425, %v780, 0
        %787 = vmatprep.subr.bf16.mxu0 0
        %788 = vmatpush1.bf16.xpose.msra.mxu0 %v785
        %789 = vmatprep.subr.bf16.mxu0 0
        %790 = vmatpush1.bf16.xpose.msra.mxu0 0
        %791 = vmatprep.subr.bf16.mxu0 0
        %792 = vmatpush1.bf16.xpose.msra.mxu0 0
        %793 = vmatprep.subr.bf16.mxu0 0
        %794 = vmatpush1.bf16.xpose.msra.mxu0 0
        %795 = vmatprep.subr.bf16.mxu0 0
        %796 = vmatpush1.bf16.xpose.msra.mxu0 0
        %797 = vmatprep.subr.bf16.mxu0 0
        %798 = vmatpush1.bf16.xpose.msra.mxu0 0
        %799 = vmatprep.subr.bf16.mxu0 0
        %800 = vmatpush1.bf16.xpose.msra.mxu0 0
        %801 = vmatprep.subr.bf16.mxu0 0
        %802 = vmatpush1.bf16.xpose.msra.mxu0 0
        %803 = vmatprep.subr.bf16.mxu0 0
        %804 = vmatpush1.bf16.xpose.msra.mxu0 0
        %805 = vmatprep.subr.bf16.mxu0 0
        %806 = vmatpush1.bf16.xpose.msra.mxu0 0
        %807 = vmatprep.subr.bf16.mxu0 0
        %808 = vmatpush1.bf16.xpose.msra.mxu0 0
        %809 = vmatprep.subr.bf16.mxu0 0
        %810 = vmatpush1.bf16.xpose.msra.mxu0 0
        %811 = vmatprep.subr.bf16.mxu0 0
        %812 = vmatpush1.bf16.xpose.msra.mxu0 0
        %813 = vmatprep.subr.bf16.mxu0 0
        %814 = vmatpush1.bf16.xpose.msra.mxu0 0
        %815 = vmatprep.subr.bf16.mxu0 0
        %816 = vmatpush1.bf16.xpose.msra.mxu0 0
        %817 = vmatprep.subr.bf16.mxu0 0
        %818 = vmatpush1.bf16.xpose.msra.mxu0 0
        %819 = vmatprep.mubr.bf16.mxu0 0
        %820 = vmatmul.mubr.bf16.gmra.mrb[0].mxu0 %v782
        %v821 = vpop.f32.mrb[0].mxu0
        %v822 = vadd.f32 0.0, %v821
        %v823 = vpop.f32.mrb[0].mxu0
        %v824 = vpop.f32.mrb[0].mxu0
        %v825 = vpop.f32.mrb[0].mxu0
        %826 = vdwg.mxu0
        %v827 = vmul.f32 %v822, 0.35355338
        %v828 = vsel %vm425, %v827, -inf
        %829 = vmax.xlane.f32.xlu0 %v828
        %v830 = vpop.xlane.xlu0 %829
        %v831 = vsub.f32 %v827, %v830
        %v832 = vmul.f32 %v831, 1.442695
        %v833 = vpow.pop %v832
        %v834 = vsel %vm425, %v833, 0.0
        %835 = vadd.xlane.f32.xlu0 %v834
        %v836 = vpop.xlane.xlu0 %835
        %v837 = vrcp.pop %v836
        %v838 = vmul.f32 %v833, %v837
        %v839 = vpack.c.bf16 %v838, %v838
        %840 = vrot.lane.b32.xlu0 %v422, 104
        %v841 = vpop.permute.xlu0 %840
        %842 = vrot.lane.b32.xlu0 %v226, 104
        %v843 = vpop.permute.xlu0 %842
        %v846 = vsel %vm425, %v839, 0
        %v849 = vsel %vm488, %v841, 0
        %851 = vmatprep.subr.bf16.mxu0 0
        %852 = vmatpush1.bf16.msra.mxu0 %v849
        %853 = vmatprep.subr.bf16.mxu0 0
        %854 = vmatpush1.bf16.msra.mxu0 0
        %855 = vmatprep.subr.bf16.mxu0 0
        %856 = vmatpush1.bf16.msra.mxu0 0
        %857 = vmatprep.subr.bf16.mxu0 0
        %858 = vmatpush1.bf16.msra.mxu0 0
        %859 = vmatprep.subr.bf16.mxu0 0
        %860 = vmatpush1.bf16.msra.mxu0 0
        %861 = vmatprep.subr.bf16.mxu0 0
        %862 = vmatpush1.bf16.msra.mxu0 0
        %863 = vmatprep.subr.bf16.mxu0 0
        %864 = vmatpush1.bf16.msra.mxu0 0
        %865 = vmatprep.subr.bf16.mxu0 0
        %866 = vmatpush1.bf16.msra.mxu0 0
        %867 = vmatprep.subr.bf16.mxu0 0
        %868 = vmatpush1.bf16.msra.mxu0 0
        %869 = vmatprep.subr.bf16.mxu0 0
        %870 = vmatpush1.bf16.msra.mxu0 0
        %871 = vmatprep.subr.bf16.mxu0 0
        %872 = vmatpush1.bf16.msra.mxu0 0
        %873 = vmatprep.subr.bf16.mxu0 0
        %874 = vmatpush1.bf16.msra.mxu0 0
        %875 = vmatprep.subr.bf16.mxu0 0
        %876 = vmatpush1.bf16.msra.mxu0 0
        %877 = vmatprep.subr.bf16.mxu0 0
        %878 = vmatpush1.bf16.msra.mxu0 0
        %879 = vmatprep.subr.bf16.mxu0 0
        %880 = vmatpush1.bf16.msra.mxu0 0
        %881 = vmatprep.subr.bf16.mxu0 0
        %882 = vmatpush1.bf16.msra.mxu0 0
        %883 = vmatprep.mubr.bf16.mxu0 0
        %884 = vmatmul.mubr.bf16.gmra.mrb[0].mxu0 %v846
        %v885 = vpop.f32.mrb[0].mxu0
        %v886 = vadd.f32 %v843, %v885
        %v887 = vpop.f32.mrb[0].mxu0
        %v888 = vpop.f32.mrb[0].mxu0
        %v889 = vpop.f32.mrb[0].mxu0
        %890 = vdwg.mxu0
        %892 = vrot.lane.b32.xlu0 %v886, 24
        %v893 = vpop.permute.xlu0 %892
        %vm895 = vcmask 261312
        %896 = vst.msk [vmem:[#allocation2] sm:$0xff] %vm895, %v893
        %v897 = vld [vmem:[#allocation2] sm:$0xff]
        %v898 = vsel %vm266, %v897, 0.0
        %899 = vadd.xlane.f32.xlu0 %v898
        %v900 = vpop.xlane.xlu0 %899
        %v901 = vrcp.pop 32.0
        %v902 = vmul.f32 %v900, %v901
        %v903 = vmul.f32 %v897, %v897
        %v904 = vsel %vm266, %v903, 0.0
        %905 = vadd.xlane.f32.xlu0 %v904
        %v906 = vpop.xlane.xlu0 %905
        %v907 = vmul.f32 %v906, %v901
        %v908 = vmul.f32 %v902, %v902
        %v909 = vsub.f32 %v907, %v908
        %v910 = vmax.f32 %v909, 0.0
        %v911 = vsub.f32 %v897, %v902
        %v912 = vadd.f32 %v910, 1e-05
        %v913 = vrsqrt.pop %v912
        %v914 = vmul.f32 %v911, %v913
        %v915 = vlaneseq
        %v916 = vshrl.u32 %v915, 7
        %v917 = vsub.s32 3, %v916
        %v918 = vrot.slane %v247, %v917
        %v919 = vmul.f32 %v914, %v918
        %v920 = vlaneseq
        %v921 = vshrl.u32 %v920, 7
        %v922 = vsub.s32 4, %v921
        %v923 = vrot.slane %v247, %v922
        %v924 = vadd.f32 %v919, %v923
        %v925 = vpack.c.bf16 %v924, %v924
        %v926 = vlaneseq
        %v927 = vshrl.u32 %v926, 7
        %v928 = vsub.s32 5, %v927
        %v929 = vrot.slane %v247, %v928
        %v934 = vunpack.c.l.b16 %v239
        %v935 = vunpack.c.l.b16 %v240
        %v936 = vunpack.c.l.b16 %v241
        %v937 = vunpack.c.l.b16 %v242
        %v938 = vpack.c.b16 %v935, %v934
        %v939 = vpack.c.b16 %v937, %v936
        %v943 = vsel %vm266, %v925, 0
        %945 = vmatprep.subr.bf16.mxu0 0
        %946 = vmatpush1.bf16.msra.mxu0 %v938
        %947 = vmatprep.subr.bf16.mxu0 0
        %948 = vmatpush1.bf16.msra.mxu0 %v939
        %949 = vmatprep.subr.bf16.mxu0 0
        %950 = vmatpush1.bf16.msra.mxu0 0
        %951 = vmatprep.subr.bf16.mxu0 0
        %952 = vmatpush1.bf16.msra.mxu0 0
        %953 = vmatprep.subr.bf16.mxu0 0
        %954 = vmatpush1.bf16.msra.mxu0 0
        %955 = vmatprep.subr.bf16.mxu0 0
        %956 = vmatpush1.bf16.msra.mxu0 0
        %957 = vmatprep.subr.bf16.mxu0 0
        %958 = vmatpush1.bf16.msra.mxu0 0
        %959 = vmatprep.subr.bf16.mxu0 0
        %960 = vmatpush1.bf16.msra.mxu0 0
        %961 = vmatprep.subr.bf16.mxu0 0
        %962 = vmatpush1.bf16.msra.mxu0 0
        %963 = vmatprep.subr.bf16.mxu0 0
        %964 = vmatpush1.bf16.msra.mxu0 0
        %965 = vmatprep.subr.bf16.mxu0 0
        %966 = vmatpush1.bf16.msra.mxu0 0
        %967 = vmatprep.subr.bf16.mxu0 0
        %968 = vmatpush1.bf16.msra.mxu0 0
        %969 = vmatprep.subr.bf16.mxu0 0
        %970 = vmatpush1.bf16.msra.mxu0 0
        %971 = vmatprep.subr.bf16.mxu0 0
        %972 = vmatpush1.bf16.msra.mxu0 0
        %973 = vmatprep.subr.bf16.mxu0 0
        %974 = vmatpush1.bf16.msra.mxu0 0
        %975 = vmatprep.subr.bf16.mxu0 0
        %976 = vmatpush1.bf16.msra.mxu0 0
        %977 = vmatprep.mubr.bf16.mxu0 0
        %978 = vmatmul.mubr.bf16.gmra.mrb[0].mxu0 %v943
        %v979 = vpop.f32.mrb[0].mxu0
        %v980 = vadd.f32 %v929, %v979
        %v981 = vpop.f32.mrb[0].mxu0
        %v982 = vpop.f32.mrb[0].mxu0
        %v983 = vpop.f32.mrb[0].mxu0
        %984 = vdwg.mxu0
        %v985 = vmax.f32 %v980, 0.0
        %v986 = vpack.c.bf16 %v985, %v985
        %v987 = vlaneseq
        %v988 = vshrl.u32 %v987, 7
        %v989 = vsub.s32 6, %v988
        %v990 = vrot.slane %v247, %v989
        %v995 = vunpack.c.l.b16 %v243
        %v996 = vunpack.c.l.b16 %v244
        %v997 = vunpack.c.l.b16 %v245
        %v998 = vunpack.c.l.b16 %v246
        %v999 = vpack.c.b16 %v996, %v995
        %v1000 = vpack.c.b16 %v998, %v997
        %v1004 = vsel %vm266, %v986, 0
        %1006 = vmatprep.subr.bf16.mxu0 0
        %1007 = vmatpush1.bf16.msra.mxu0 %v999
        %1008 = vmatprep.subr.bf16.mxu0 0
        %1009 = vmatpush1.bf16.msra.mxu0 %v1000
        %1010 = vmatprep.subr.bf16.mxu0 0
        %1011 = vmatpush1.bf16.msra.mxu0 0
        %1012 = vmatprep.subr.bf16.mxu0 0
        %1013 = vmatpush1.bf16.msra.mxu0 0
        %1014 = vmatprep.subr.bf16.mxu0 0
        %1015 = vmatpush1.bf16.msra.mxu0 0
        %1016 = vmatprep.subr.bf16.mxu0 0
        %1017 = vmatpush1.bf16.msra.mxu0 0
        %1018 = vmatprep.subr.bf16.mxu0 0
        %1019 = vmatpush1.bf16.msra.mxu0 0
        %1020 = vmatprep.subr.bf16.mxu0 0
        %1021 = vmatpush1.bf16.msra.mxu0 0
        %1022 = vmatprep.subr.bf16.mxu0 0
        %1023 = vmatpush1.bf16.msra.mxu0 0
        %1024 = vmatprep.subr.bf16.mxu0 0
        %1025 = vmatpush1.bf16.msra.mxu0 0
        %1026 = vmatprep.subr.bf16.mxu0 0
        %1027 = vmatpush1.bf16.msra.mxu0 0
        %1028 = vmatprep.subr.bf16.mxu0 0
        %1029 = vmatpush1.bf16.msra.mxu0 0
        %1030 = vmatprep.subr.bf16.mxu0 0
        %1031 = vmatpush1.bf16.msra.mxu0 0
        %1032 = vmatprep.subr.bf16.mxu0 0
        %1033 = vmatpush1.bf16.msra.mxu0 0
        %1034 = vmatprep.subr.bf16.mxu0 0
        %1035 = vmatpush1.bf16.msra.mxu0 0
        %1036 = vmatprep.subr.bf16.mxu0 0
        %1037 = vmatpush1.bf16.msra.mxu0 0
        %1038 = vmatprep.mubr.bf16.mxu0 0
        %1039 = vmatmul.mubr.bf16.gmra.mrb[0].mxu0 %v1004
        %v1040 = vpop.f32.mrb[0].mxu0
        %v1041 = vadd.f32 %v990, %v1040
        %v1042 = vpop.f32.mrb[0].mxu0
        %v1043 = vpop.f32.mrb[0].mxu0
        %v1044 = vpop.f32.mrb[0].mxu0
        %1045 = vdwg.mxu0
        %v1046 = vadd.f32 %v924, %v1041
        %v1047 = vsel %vm266, %v1046, 0.0
        %1048 = vadd.xlane.f32.xlu0 %v1047
        %v1049 = vpop.xlane.xlu0 %1048
        %v1050 = vmul.f32 %v1049, %v901
        %v1051 = vmul.f32 %v1046, %v1046
        %v1052 = vsel %vm266, %v1051, 0.0
        %1053 = vadd.xlane.f32.xlu0 %v1052
        %v1054 = vpop.xlane.xlu0 %1053
        %v1055 = vmul.f32 %v1054, %v901
        %v1056 = vmul.f32 %v1050, %v1050
        %v1057 = vsub.f32 %v1055, %v1056
        %v1058 = vmax.f32 %v1057, 0.0
        %v1059 = vsub.f32 %v1046, %v1050
        %v1060 = vadd.f32 %v1058, 1e-05
        %v1061 = vrsqrt.pop %v1060
        %v1062 = vmul.f32 %v1059, %v1061
        %v1063 = vlaneseq
        %v1064 = vshrl.u32 %v1063, 7
        %v1065 = vsub.s32 7, %v1064
        %v1066 = vrot.slane %v247, %v1065
        %v1067 = vmul.f32 %v1062, %v1066
        %v1068 = vlaneseq
        %v1069 = vshrl.u32 %v1068, 7
        %v1070 = vsub.s32 0, %v1069
        %v1071 = vrot.slane %v248, %v1070
        %v1072 = vadd.f32 %v1067, %v1071
        %1073 = vst.msk [vmem:[%s203] sm:$0xff] %vm266, %v1072
        %s1074 = sand.u32 %s115, 1
        %s1075 = scalar_lea.sflag [#allocation4], %s1074
        %s1076 = sand.u32 %s115, 1
        %s1077 = smul.addr %s1076, 8
        %s1078 = scalar_lea.vmem [#allocation3], %s1077
        // Predicated region
        $region37: #{tpu_custom_call.1} parent=31 // pred_check
          %p1079 = pneg %p125
        $region38: #{tpu_custom_call.1} parent=31 // pred_check_branch
          %1081 = sbr.rel (%p1079) target = $region40
        $region39: #{tpu_custom_call.1} parent=31 // pred_region
          %s1083 = ssub.s32 128, 128
          %1084 = vsyncadd %s1075, %s1083
          %s1085 = smul.addr %s21, 128
          %s1086 = scalar_lea.hbm %s3, %s1085
          %s1088 = sshll.u32 %s1078, 4
          %s1089 = int_to_ptr.vmem [resolvable:$true] %s1088
          %1091 = dma.vmem_to_hbm [thread:$0]  %s1089, 128, %s1086, %s1075
        $region40: #{tpu_custom_call.1} parent=31 // pred_fallthru
          _
      $region32: #{tpu_custom_call.1} parent=5 // pred_fallthru
        _
      %p1092 = scmp.le.s32.totalorder 2, %s12
      // Predicated region
      $region41: #{tpu_custom_call.1} parent=5 // pred_check
        %p1093 = pneg %p1092
      $region42: #{tpu_custom_call.1} parent=5 // pred_check_branch
        %1095 = sbr.rel (%p1093) target = $region44
      $region43: #{tpu_custom_call.1} parent=5 // pred_region
        %s1096 = ssub.s32 %s12, 2
        // Predicated region
        $region45: #{tpu_custom_call.1} parent=43 // pred_check
          %p1097 = pneg %p131
        $region46: #{tpu_custom_call.1} parent=43 // pred_check_branch
          %1099 = sbr.rel (%p1097) target = $region48
        $region47: #{tpu_custom_call.1} parent=43 // pred_region
          %s1100 = sand.u32 %s116, 1
          %s1101 = scalar_lea.sflag [#allocation4], %s1100
          %s1102 = sand.u32 %s116, 1
          %s1103 = smul.addr %s1102, 8
          %s1104 = scalar_lea.vmem [#allocation3], %s1103
          %1105 = dma.done %s1101, 128
        $region48: #{tpu_custom_call.1} parent=43 // pred_fallthru
          _
      $region44: #{tpu_custom_call.1} parent=5 // pred_fallthru
        _
    $region6: #{tpu_custom_call.1} parent=1 // loop_footer
      %s16 = sadd.s32 1, %s12
    $region7: #{tpu_custom_call.1} parent=1 // loop_footer_branch
      %11 = sbr.rel target = $region3
    $region8: #{tpu_custom_call.1} parent=1 // loop_exit
      _
    %1106 = vsyncpa [#allocation4], 1
    %s1107 = scalar_lea.sflag [#allocation4], 1
    %1108 = vsyncpa %s1107, 1

</llo_original>
